<compile_context>
chip_gen: v5e
topology: v5e:2x2
jax: 0.10.0
libtpu: 0.0.40
codegen_flags: <defaults>
</compile_context>

<pallas_src>
import functools

import jax
import jax.numpy as jnp
from jax.experimental import pallas as pl
from jax.experimental.pallas import tpu as pltpu


# ----------------------------- configuration --------------------------------
B = 2               # real batch
BP = 8              # batch padded to the f32 sublane tile
T = 8               # sequence length
D = 16              # observation_dim
H = 32              # rnn_hidden_size
NUM_LAYERS = 2      # rnn_num_layers
ACTION_BRANCHES = 2
ACTION_DIM = 3
A_OUT = ACTION_DIM ** ACTION_BRANCHES   # 9
SHARED = 32         # shared_network_size = (32,)
VHID = 32           # value_stream_size   = (32,)
AHID = 32           # advantage_streams_size = (32,)
HW = VHID + AHID    # fused head width = 64
G3H = 3 * H         # 96

# --- GRU slab row layout (width = 3H = 96); every block starts on a multiple of 8.
R_WIH0 = 0                      # (D,  96)
R_WHH0 = R_WIH0 + D             # (H,  96)   = 16
R_B0GX = R_WHH0 + H             # (8,  96)   = 48   row 0: bih0 + [bhh0_r|bhh0_z|0]
R_B0HN = R_B0GX + 8             # (8,  96)   = 56   cols 0:H = bhh0_n replicated
R_WIH1 = R_B0HN + 8             # (H,  96)   = 64
R_WHH1 = R_WIH1 + H             # (H,  96)   = 96
R_B1GX = R_WHH1 + H             # (8,  96)   = 128
R_B1HN = R_B1GX + 8             # (8,  96)   = 136
GRU_ROWS = R_B1HN + 8           # 144

# --- MLP slab row layout (width = HW = 64); every block starts on a multiple of 8.
R_WS = 0                        # (H,  64)  shared weight, cols 0:SHARED valid
R_BS = R_WS + H                 # (8,  64)  shared bias, replicated rows
R_W1F = R_BS + 8                # (64, 64)  fused [wv1 | wa1] (bottom 32 rows zero)
R_B1F = R_W1F + HW              # (8,  64)  fused [bv1 | ba1], replicated rows
R_W2Q = R_B1F + 8               # (64, 64)  fused 2nd layer + dueling combine
R_B2Q = R_W2Q + HW              # (8,  64)  fused bias, replicated rows
MLP_ROWS = R_B2Q + 8            # 184


# ------------------------------- kernel -------------------------------------
def duel_dqn_rnn_kernel(x_ref, gru_ref, mlp_ref, q_ref, h0_all_ref):
    # x_ref:      (T*BP, D)   time-major, batch padded to 8
    # gru_ref:    (GRU_ROWS, 3H)
    # mlp_ref:    (MLP_ROWS, HW)
    # q_ref:      (BP, HW)    cols 0:A_OUT valid
    # h0_all_ref: (T*BP, H)   scratch: layer-0 hidden states for all timesteps
    x_tb = x_ref[...]
    g = gru_ref[...]
    m = mlp_ref[...]

    # Tile-aligned static slices of the parameter slabs (all row offsets % 8 == 0).
    wih0 = g[R_WIH0:R_WIH0 + D, :]
    whh0 = g[R_WHH0:R_WHH0 + H, :]
    b0gx = g[R_B0GX:R_B0GX + 1, :]          # (1, 3H): bih0 + bhh0(r|z)
    b0hn = g[R_B0HN:R_B0HN + BP, :H]        # (BP, H): bhh0_n, pre-replicated
    wih1 = g[R_WIH1:R_WIH1 + H, :]
    whh1 = g[R_WHH1:R_WHH1 + H, :]
    b1gx = g[R_B1GX:R_B1GX + 1, :]
    b1hn = g[R_B1HN:R_B1HN + BP, :H]

    def sigmoid(v):
        # single EUP push (tanh); exact rewrite of the logistic function
        return 0.5 * jnp.tanh(0.5 * v) + 0.5

    def gru_cell(gx, gh, b_hn, h):
        # PyTorch gate order [r | z | n]; r/z biases already folded into gx.
        rz = sigmoid(gx[:, :2 * H] + gh[:, :2 * H])
        r = rz[:, :H]
        z = rz[:, H:]
        n = jnp.tanh(gx[:, 2 * H:] + r * (gh[:, 2 * H:] + b_hn))
        return (1.0 - z) * n + z * h

    # ---- layer 0: hoisted input projection, then recurrence over T ----------
    gx0_all = jnp.dot(x_tb, wih0, preferred_element_type=jnp.float32) + b0gx   # (T*BP, 3H)
    h0 = jnp.zeros((BP, H), jnp.float32)
    for t in range(T):                                       # fully unrolled, T static
        gh0 = jnp.dot(h0, whh0, preferred_element_type=jnp.float32)
        h0 = gru_cell(gx0_all[t * BP:(t + 1) * BP, :], gh0, b0hn, h0)
        h0_all_ref[t * BP:(t + 1) * BP, :] = h0

    # ---- layer 1: batched input projection of ALL h0(t), then recurrence ----
    gx1_all = jnp.dot(h0_all_ref[...], wih1,
                      preferred_element_type=jnp.float32) + b1gx               # (T*BP, 3H)
    h1 = jnp.zeros((BP, H), jnp.float32)
    for t in range(T):
        gh1 = jnp.dot(h1, whh1, preferred_element_type=jnp.float32)
        h1 = gru_cell(gx1_all[t * BP:(t + 1) * BP, :], gh1, b1hn, h1)
    # h1 == GRU output out[:, -1, :] (top layer, last timestep), rows 0:B valid.

    # ---- fused MLP head ------------------------------------------------------
    ws_p = m[R_WS:R_WS + H, :]
    bs_b = m[R_BS:R_BS + BP, :]
    w1f = m[R_W1F:R_W1F + HW, :]
    b1f = m[R_B1F:R_B1F + BP, :]
    w2q = m[R_W2Q:R_W2Q + HW, :]
    b2q = m[R_B2Q:R_B2Q + BP, :]

    # shared Linear + ReLU (cols SHARED:HW of s are exactly zero by construction)
    s = jnp.maximum(jnp.dot(h1, ws_p, preferred_element_type=jnp.float32) + bs_b, 0.0)
    # fused value/advantage hidden layer: va = [relu(v_hidden) | relu(a_hidden)]
    va = jnp.maximum(jnp.dot(s, w1f, preferred_element_type=jnp.float32) + b1f, 0.0)
    # fused second layer + dueling combine: cols 0:A_OUT of q64 ARE the q-values
    q64 = jnp.dot(va, w2q, preferred_element_type=jnp.float32) + b2q
    q_ref[...] = q64.astype(q_ref.dtype)


# ------------------------------ wrapper --------------------------------------
@functools.partial(jax.jit)
def duel_dqn_rnn(x, gru_slab, mlp_slab):
    # Time-major flatten with batch padded to the sublane tile (8) so every
    # per-step slice in the kernel is (8, .) and tile-aligned.
    xt = jnp.transpose(x, (1, 0, 2))                         # (T, B, D)
    xt = jnp.pad(xt, ((0, 0), (0, BP - B), (0, 0)))          # (T, BP, D)
    x_tb = xt.reshape(T * BP, D)

    vmem = pl.BlockSpec(memory_space=pltpu.MemorySpace.VMEM)
    # Single grid point; total footprint ~150 KiB — no grid tiling, no
    # pipelining, no multi-core split (per perf review, on v5e/v6e/v7x alike).
    out = pl.pallas_call(
        duel_dqn_rnn_kernel,
        out_shape=jax.ShapeDtypeStruct((BP, HW), jnp.float32),
        in_specs=[vmem, vmem, vmem],
        out_specs=vmem,
        scratch_shapes=[pltpu.VMEM((T * BP, H), jnp.float32)],
    )(x_tb, gru_slab, mlp_slab)
    return out[:B, :A_OUT]


# --------------------------- parameter packing --------------------------------
def pack_params(params):
    """Pack the 18 per-layer tensors into two tile-aligned f32 slabs.

    GRU slab (GRU_ROWS, 3H): per layer [w_ih | w_hh | folded gx bias | replicated
    b_hh_n]; MLP slab (MLP_ROWS, HW): shared layer + fused value/advantage head
    with the dueling combine folded into the last weight block.
    """
    (wih0, whh0, bih0, bhh0, wih1, whh1, bih1, bhh1,
     ws, bs, wv1, bv1, wv2, bv2, wa1, ba1, wa2, ba2) = params

    def gru_layer_blocks(wih, whh, bih, bhh):
        # gx bias = b_ih (all gates) + b_hh for the r|z gates (folded);
        # b_hh_n stays separate (inside r * (W_hn h + b_hn)) and is replicated.
        b_gx = bih.at[:, :2 * H].add(bhh[:, :2 * H])                     # (1, 3H)
        b_gx_blk = jnp.zeros((8, G3H), jnp.float32).at[0, :].set(b_gx[0])
        b_hn_blk = jnp.zeros((8, G3H), jnp.float32).at[:, :H].set(
            jnp.broadcast_to(bhh[:, 2 * H:], (8, H)))
        return [wih, whh, b_gx_blk, b_hn_blk]

    gru_slab = jnp.concatenate(
        gru_layer_blocks(wih0, whh0, bih0, bhh0)
        + gru_layer_blocks(wih1, whh1, bih1, bhh1), axis=0)
    assert gru_slab.shape == (GRU_ROWS, G3H)

    # --- shared layer, padded to HW columns -----------------------------------
    ws_p = jnp.zeros((H, HW), jnp.float32).at[:, :SHARED].set(ws)
    bs_b = jnp.broadcast_to(
        jnp.zeros((1, HW), jnp.float32).at[:, :SHARED].set(bs), (8, HW))

    # --- fused value/advantage hidden layer ------------------------------------
    w1f = jnp.zeros((HW, HW), jnp.float32)
    w1f = w1f.at[:SHARED, :VHID].set(wv1)
    w1f = w1f.at[:SHARED, VHID:VHID + AHID].set(wa1)
    b1f = jnp.zeros((1, HW), jnp.float32)
    b1f = b1f.at[:, :VHID].set(bv1).at[:, VHID:VHID + AHID].set(ba1)
    b1f_b = jnp.broadcast_to(b1f, (8, HW))

    # --- fused second layer + dueling combine ----------------------------------
    # q_j = vh.wv2 + bv2 + ah.(wa2 C)_j + (ba2 C)_j   with  C = I - (1/9) 11^T
    # (exact rewrite of  q = V + A - mean(A)).
    Cmat = jnp.eye(A_OUT, dtype=jnp.float32) - jnp.full(
        (A_OUT, A_OUT), 1.0 / A_OUT, jnp.float32)
    wa2c = wa2 @ Cmat                                                   # (AHID, 9)
    ba2c = ba2 @ Cmat                                                   # (1, 9)
    w2q = jnp.zeros((HW, HW), jnp.float32)
    w2q = w2q.at[:VHID, :A_OUT].set(jnp.broadcast_to(wv2, (VHID, A_OUT)))
    w2q = w2q.at[VHID:VHID + AHID, :A_OUT].set(wa2c)
    b2q = jnp.zeros((1, HW), jnp.float32).at[:, :A_OUT].set(bv2 + ba2c)
    b2q_b = jnp.broadcast_to(b2q, (8, HW))

    mlp_slab = jnp.concatenate([ws_p, bs_b, w1f, b1f_b, w2q, b2q_b], axis=0)
    assert mlp_slab.shape == (MLP_ROWS, HW)
    return gru_slab, mlp_slab


# --------------------------- parameter init ----------------------------------
def init_params(key):
    """Deterministic synthetic parameters (uniform in +/- 1/sqrt(fan_in)).

    Weights stored pre-transposed to (in_features, out_features); GRU gate
    order is PyTorch's [r | z | n].
    """
    def u(key, shape, fan_in):
        bound = 1.0 / jnp.sqrt(jnp.float32(fan_in))
        return jax.random.uniform(key, shape, jnp.float32, -bound, bound)

    keys = jax.random.split(key, 20)
    k = iter(keys)
    params = [
        # GRU layer 0
        u(next(k), (D, 3 * H), H), u(next(k), (H, 3 * H), H),
        u(next(k), (1, 3 * H), H), u(next(k), (1, 3 * H), H),
        # GRU layer 1
        u(next(k), (H, 3 * H), H), u(next(k), (H, 3 * H), H),
        u(next(k), (1, 3 * H), H), u(next(k), (1, 3 * H), H),
        # shared Linear
        u(next(k), (H, SHARED), H), u(next(k), (1, SHARED), H),
        # value stream
        u(next(k), (SHARED, VHID), SHARED), u(next(k), (1, VHID), SHARED),
        u(next(k), (VHID, 1), VHID), u(next(k), (1, 1), VHID),
        # advantage stream
        u(next(k), (SHARED, AHID), SHARED), u(next(k), (1, AHID), SHARED),
        u(next(k), (AHID, A_OUT), AHID), u(next(k), (1, A_OUT), AHID),
    ]
    return params


# ---------------------------- pure-JAX reference ------------------------------
def reference(x, params):
    (wih0, whh0, bih0, bhh0, wih1, whh1, bih1, bhh1,
     ws, bs, wv1, bv1, wv2, bv2, wa1, ba1, wa2, ba2) = params

    def cell(xt, h, w_ih, w_hh, b_ih, b_hh):
        gx = xt @ w_ih + b_ih
        gh = h @ w_hh + b_hh
        r = jax.nn.sigmoid(gx[:, :H] + gh[:, :H])
        z = jax.nn.sigmoid(gx[:, H:2 * H] + gh[:, H:2 * H])
        n = jnp.tanh(gx[:, 2 * H:] + r * gh[:, 2 * H:])
        return (1.0 - z) * n + z * h

    h0 = jnp.zeros((B, H), jnp.float32)
    h1 = jnp.zeros((B, H), jnp.float32)
    for t in range(T):
        h0 = cell(x[:, t, :], h0, wih0, whh0, bih0, bhh0)
        h1 = cell(h0, h1, wih1, whh1, bih1, bhh1)
    s = jnp.maximum(h1 @ ws + bs, 0.0)
    v = jnp.maximum(s @ wv1 + bv1, 0.0) @ wv2 + bv2
    a = jnp.maximum(s @ wa1 + ba1, 0.0) @ wa2 + ba2
    return v + a - a.mean(axis=1, keepdims=True)


# --------------------------------- main ---------------------------------------
if __name__ == "__main__":
    key = jax.random.PRNGKey(0)
    kx, kp = jax.random.split(key)
    x = jax.random.normal(kx, (B, T, D), jnp.float32)   # (batch, seq, obs_dim)
    params = init_params(kp)
    gru_slab, mlp_slab = pack_params(params)

    q = duel_dqn_rnn(x, gru_slab, mlp_slab)
    q = jax.block_until_ready(q)

    q_ref = reference(x, params)
    assert q.shape == (B, A_OUT)
    assert jnp.allclose(q, q_ref, atol=1e-4, rtol=1e-4), (q, q_ref)

    print("KERNEL_OK")
</pallas_src>

<mosaic_0001>
module attributes {stable_mosaic.version = 11 : i64} {
  func.func @duel_dqn_rnn_kernel(%arg0: memref<64x16xf32, #tpu.memory_space<vmem>>, %arg1: memref<144x96xf32, #tpu.memory_space<vmem>>, %arg2: memref<184x64xf32, #tpu.memory_space<vmem>>, %arg3: memref<8x64xf32, #tpu.memory_space<vmem>>, %arg4: memref<64x32xf32, #tpu.memory_space<vmem>>) attributes {dimension_semantics = [], scalar_prefetch = 0 : i64, scratch_operands = 1 : i64, tpu.core_type = #tpu.core_type<tc>} {
    %c0 = arith.constant 0 : index
    %c0_0 = arith.constant 0 : index
    %0 = vector.load %arg0[%c0, %c0_0] : memref<64x16xf32, #tpu.memory_space<vmem>>, vector<64x16xf32>
    %c0_1 = arith.constant 0 : index
    %c0_2 = arith.constant 0 : index
    %1 = vector.load %arg1[%c0_1, %c0_2] : memref<144x96xf32, #tpu.memory_space<vmem>>, vector<144x96xf32>
    %c0_3 = arith.constant 0 : index
    %c0_4 = arith.constant 0 : index
    %2 = vector.load %arg2[%c0_3, %c0_4] : memref<184x64xf32, #tpu.memory_space<vmem>>, vector<184x64xf32>
    %3 = vector.extract_strided_slice %1 {offsets = [0, 0], sizes = [16, 96], strides = [1, 1]} : vector<144x96xf32> to vector<16x96xf32>
    %4 = vector.extract_strided_slice %1 {offsets = [16, 0], sizes = [32, 96], strides = [1, 1]} : vector<144x96xf32> to vector<32x96xf32>
    %5 = vector.extract_strided_slice %1 {offsets = [48, 0], sizes = [1, 96], strides = [1, 1]} : vector<144x96xf32> to vector<1x96xf32>
    %6 = vector.extract_strided_slice %1 {offsets = [56, 0], sizes = [8, 32], strides = [1, 1]} : vector<144x96xf32> to vector<8x32xf32>
    %7 = vector.extract_strided_slice %1 {offsets = [64, 0], sizes = [32, 96], strides = [1, 1]} : vector<144x96xf32> to vector<32x96xf32>
    %8 = vector.extract_strided_slice %1 {offsets = [96, 0], sizes = [32, 96], strides = [1, 1]} : vector<144x96xf32> to vector<32x96xf32>
    %9 = vector.extract_strided_slice %1 {offsets = [128, 0], sizes = [1, 96], strides = [1, 1]} : vector<144x96xf32> to vector<1x96xf32>
    %10 = vector.extract_strided_slice %1 {offsets = [136, 0], sizes = [8, 32], strides = [1, 1]} : vector<144x96xf32> to vector<8x32xf32>
    %cst = arith.constant dense<0.000000e+00> : vector<64x96xf32>
    %11 = tpu.matmul %0, %3, %cst {dimension_numbers = #tpu.dot_dimension_numbers<[1], [0], [0], [1], [0, 0, 1, 1], [], []>} : vector<64x16xf32>, vector<16x96xf32>, vector<64x96xf32> -> vector<64x96xf32>
    %12 = vector.broadcast %5 : vector<1x96xf32> to vector<64x96xf32>
    %13 = arith.addf %11, %12 : vector<64x96xf32>
    %cst_5 = arith.constant 0.000000e+00 : f32
    %14 = vector.broadcast %cst_5 : f32 to vector<8x32xf32>
    %cst_6 = arith.constant dense<0.000000e+00> : vector<8x96xf32>
    %15 = tpu.matmul %14, %4, %cst_6 {dimension_numbers = #tpu.dot_dimension_numbers<[1], [0], [0], [1], [0, 0, 1, 1], [], []>} : vector<8x32xf32>, vector<32x96xf32>, vector<8x96xf32> -> vector<8x96xf32>
    %16 = vector.extract_strided_slice %13 {offsets = [0, 0], sizes = [8, 96], strides = [1, 1]} : vector<64x96xf32> to vector<8x96xf32>
    %17 = vector.extract_strided_slice %16 {offsets = [0, 0], sizes = [8, 64], strides = [1, 1]} : vector<8x96xf32> to vector<8x64xf32>
    %18 = vector.extract_strided_slice %15 {offsets = [0, 0], sizes = [8, 64], strides = [1, 1]} : vector<8x96xf32> to vector<8x64xf32>
    %19 = arith.addf %17, %18 : vector<8x64xf32>
    %cst_7 = arith.constant 5.000000e-01 : f32
    %20 = vector.broadcast %cst_7 : f32 to vector<8x64xf32>
    %21 = arith.mulf %20, %19 : vector<8x64xf32>
    %22 = math.tanh %21 : vector<8x64xf32>
    %cst_8 = arith.constant 5.000000e-01 : f32
    %23 = vector.broadcast %cst_8 : f32 to vector<8x64xf32>
    %24 = arith.mulf %23, %22 : vector<8x64xf32>
    %cst_9 = arith.constant 5.000000e-01 : f32
    %25 = vector.broadcast %cst_9 : f32 to vector<8x64xf32>
    %26 = arith.addf %24, %25 : vector<8x64xf32>
    %27 = vector.extract_strided_slice %26 {offsets = [0, 0], sizes = [8, 32], strides = [1, 1]} : vector<8x64xf32> to vector<8x32xf32>
    %28 = vector.extract_strided_slice %26 {offsets = [0, 32], sizes = [8, 32], strides = [1, 1]} : vector<8x64xf32> to vector<8x32xf32>
    %29 = vector.extract_strided_slice %16 {offsets = [0, 64], sizes = [8, 32], strides = [1, 1]} : vector<8x96xf32> to vector<8x32xf32>
    %30 = vector.extract_strided_slice %15 {offsets = [0, 64], sizes = [8, 32], strides = [1, 1]} : vector<8x96xf32> to vector<8x32xf32>
    %31 = arith.addf %30, %6 : vector<8x32xf32>
    %32 = arith.mulf %27, %31 : vector<8x32xf32>
    %33 = arith.addf %29, %32 : vector<8x32xf32>
    %34 = math.tanh %33 : vector<8x32xf32>
    %cst_10 = arith.constant 1.000000e+00 : f32
    %35 = vector.broadcast %cst_10 : f32 to vector<8x32xf32>
    %36 = arith.subf %35, %28 : vector<8x32xf32>
    %37 = arith.mulf %36, %34 : vector<8x32xf32>
    %38 = arith.mulf %28, %14 : vector<8x32xf32>
    %39 = arith.addf %37, %38 : vector<8x32xf32>
    %c0_11 = arith.constant 0 : index
    %c0_12 = arith.constant 0 : index
    %40 = vector.load %arg4[%c0_11, %c0_12] : memref<64x32xf32, #tpu.memory_space<vmem>>, vector<8x32xf32>
    tpu.vector_store %arg4[%c0_11, %c0_12], %39 {strides = array<i32>} : memref<64x32xf32, #tpu.memory_space<vmem>>, vector<8x32xf32>,
    %cst_13 = arith.constant dense<0.000000e+00> : vector<8x96xf32>
    %41 = tpu.matmul %39, %4, %cst_13 {dimension_numbers = #tpu.dot_dimension_numbers<[1], [0], [0], [1], [0, 0, 1, 1], [], []>} : vector<8x32xf32>, vector<32x96xf32>, vector<8x96xf32> -> vector<8x96xf32>
    %42 = vector.extract_strided_slice %13 {offsets = [8, 0], sizes = [8, 96], strides = [1, 1]} : vector<64x96xf32> to vector<8x96xf32>
    %43 = vector.extract_strided_slice %42 {offsets = [0, 0], sizes = [8, 64], strides = [1, 1]} : vector<8x96xf32> to vector<8x64xf32>
    %44 = vector.extract_strided_slice %41 {offsets = [0, 0], sizes = [8, 64], strides = [1, 1]} : vector<8x96xf32> to vector<8x64xf32>
    %45 = arith.addf %43, %44 : vector<8x64xf32>
    %cst_14 = arith.constant 5.000000e-01 : f32
    %46 = vector.broadcast %cst_14 : f32 to vector<8x64xf32>
    %47 = arith.mulf %46, %45 : vector<8x64xf32>
    %48 = math.tanh %47 : vector<8x64xf32>
    %cst_15 = arith.constant 5.000000e-01 : f32
    %49 = vector.broadcast %cst_15 : f32 to vector<8x64xf32>
    %50 = arith.mulf %49, %48 : vector<8x64xf32>
    %cst_16 = arith.constant 5.000000e-01 : f32
    %51 = vector.broadcast %cst_16 : f32 to vector<8x64xf32>
    %52 = arith.addf %50, %51 : vector<8x64xf32>
    %53 = vector.extract_strided_slice %52 {offsets = [0, 0], sizes = [8, 32], strides = [1, 1]} : vector<8x64xf32> to vector<8x32xf32>
    %54 = vector.extract_strided_slice %52 {offsets = [0, 32], sizes = [8, 32], strides = [1, 1]} : vector<8x64xf32> to vector<8x32xf32>
    %55 = vector.extract_strided_slice %42 {offsets = [0, 64], sizes = [8, 32], strides = [1, 1]} : vector<8x96xf32> to vector<8x32xf32>
    %56 = vector.extract_strided_slice %41 {offsets = [0, 64], sizes = [8, 32], strides = [1, 1]} : vector<8x96xf32> to vector<8x32xf32>
    %57 = arith.addf %56, %6 : vector<8x32xf32>
    %58 = arith.mulf %53, %57 : vector<8x32xf32>
    %59 = arith.addf %55, %58 : vector<8x32xf32>
    %60 = math.tanh %59 : vector<8x32xf32>
    %cst_17 = arith.constant 1.000000e+00 : f32
    %61 = vector.broadcast %cst_17 : f32 to vector<8x32xf32>
    %62 = arith.subf %61, %54 : vector<8x32xf32>
    %63 = arith.mulf %62, %60 : vector<8x32xf32>
    %64 = arith.mulf %54, %39 : vector<8x32xf32>
    %65 = arith.addf %63, %64 : vector<8x32xf32>
    %c8 = arith.constant 8 : index
    %c0_18 = arith.constant 0 : index
    %66 = vector.load %arg4[%c8, %c0_18] : memref<64x32xf32, #tpu.memory_space<vmem>>, vector<8x32xf32>
    tpu.vector_store %arg4[%c8, %c0_18], %65 {strides = array<i32>} : memref<64x32xf32, #tpu.memory_space<vmem>>, vector<8x32xf32>,
    %cst_19 = arith.constant dense<0.000000e+00> : vector<8x96xf32>
    %67 = tpu.matmul %65, %4, %cst_19 {dimension_numbers = #tpu.dot_dimension_numbers<[1], [0], [0], [1], [0, 0, 1, 1], [], []>} : vector<8x32xf32>, vector<32x96xf32>, vector<8x96xf32> -> vector<8x96xf32>
    %68 = vector.extract_strided_slice %13 {offsets = [16, 0], sizes = [8, 96], strides = [1, 1]} : vector<64x96xf32> to vector<8x96xf32>
    %69 = vector.extract_strided_slice %68 {offsets = [0, 0], sizes = [8, 64], strides = [1, 1]} : vector<8x96xf32> to vector<8x64xf32>
    %70 = vector.extract_strided_slice %67 {offsets = [0, 0], sizes = [8, 64], strides = [1, 1]} : vector<8x96xf32> to vector<8x64xf32>
    %71 = arith.addf %69, %70 : vector<8x64xf32>
    %cst_20 = arith.constant 5.000000e-01 : f32
    %72 = vector.broadcast %cst_20 : f32 to vector<8x64xf32>
    %73 = arith.mulf %72, %71 : vector<8x64xf32>
    %74 = math.tanh %73 : vector<8x64xf32>
    %cst_21 = arith.constant 5.000000e-01 : f32
    %75 = vector.broadcast %cst_21 : f32 to vector<8x64xf32>
    %76 = arith.mulf %75, %74 : vector<8x64xf32>
    %cst_22 = arith.constant 5.000000e-01 : f32
    %77 = vector.broadcast %cst_22 : f32 to vector<8x64xf32>
    %78 = arith.addf %76, %77 : vector<8x64xf32>
    %79 = vector.extract_strided_slice %78 {offsets = [0, 0], sizes = [8, 32], strides = [1, 1]} : vector<8x64xf32> to vector<8x32xf32>
    %80 = vector.extract_strided_slice %78 {offsets = [0, 32], sizes = [8, 32], strides = [1, 1]} : vector<8x64xf32> to vector<8x32xf32>
    %81 = vector.extract_strided_slice %68 {offsets = [0, 64], sizes = [8, 32], strides = [1, 1]} : vector<8x96xf32> to vector<8x32xf32>
    %82 = vector.extract_strided_slice %67 {offsets = [0, 64], sizes = [8, 32], strides = [1, 1]} : vector<8x96xf32> to vector<8x32xf32>
    %83 = arith.addf %82, %6 : vector<8x32xf32>
    %84 = arith.mulf %79, %83 : vector<8x32xf32>
    %85 = arith.addf %81, %84 : vector<8x32xf32>
    %86 = math.tanh %85 : vector<8x32xf32>
    %cst_23 = arith.constant 1.000000e+00 : f32
    %87 = vector.broadcast %cst_23 : f32 to vector<8x32xf32>
    %88 = arith.subf %87, %80 : vector<8x32xf32>
    %89 = arith.mulf %88, %86 : vector<8x32xf32>
    %90 = arith.mulf %80, %65 : vector<8x32xf32>
    %91 = arith.addf %89, %90 : vector<8x32xf32>
    %c16 = arith.constant 16 : index
    %c0_24 = arith.constant 0 : index
    %92 = vector.load %arg4[%c16, %c0_24] : memref<64x32xf32, #tpu.memory_space<vmem>>, vector<8x32xf32>
    tpu.vector_store %arg4[%c16, %c0_24], %91 {strides = array<i32>} : memref<64x32xf32, #tpu.memory_space<vmem>>, vector<8x32xf32>,
    %cst_25 = arith.constant dense<0.000000e+00> : vector<8x96xf32>
    %93 = tpu.matmul %91, %4, %cst_25 {dimension_numbers = #tpu.dot_dimension_numbers<[1], [0], [0], [1], [0, 0, 1, 1], [], []>} : vector<8x32xf32>, vector<32x96xf32>, vector<8x96xf32> -> vector<8x96xf32>
    %94 = vector.extract_strided_slice %13 {offsets = [24, 0], sizes = [8, 96], strides = [1, 1]} : vector<64x96xf32> to vector<8x96xf32>
    %95 = vector.extract_strided_slice %94 {offsets = [0, 0], sizes = [8, 64], strides = [1, 1]} : vector<8x96xf32> to vector<8x64xf32>
    %96 = vector.extract_strided_slice %93 {offsets = [0, 0], sizes = [8, 64], strides = [1, 1]} : vector<8x96xf32> to vector<8x64xf32>
    %97 = arith.addf %95, %96 : vector<8x64xf32>
    %cst_26 = arith.constant 5.000000e-01 : f32
    %98 = vector.broadcast %cst_26 : f32 to vector<8x64xf32>
    %99 = arith.mulf %98, %97 : vector<8x64xf32>
    %100 = math.tanh %99 : vector<8x64xf32>
    %cst_27 = arith.constant 5.000000e-01 : f32
    %101 = vector.broadcast %cst_27 : f32 to vector<8x64xf32>
    %102 = arith.mulf %101, %100 : vector<8x64xf32>
    %cst_28 = arith.constant 5.000000e-01 : f32
    %103 = vector.broadcast %cst_28 : f32 to vector<8x64xf32>
    %104 = arith.addf %102, %103 : vector<8x64xf32>
    %105 = vector.extract_strided_slice %104 {offsets = [0, 0], sizes = [8, 32], strides = [1, 1]} : vector<8x64xf32> to vector<8x32xf32>
    %106 = vector.extract_strided_slice %104 {offsets = [0, 32], sizes = [8, 32], strides = [1, 1]} : vector<8x64xf32> to vector<8x32xf32>
    %107 = vector.extract_strided_slice %94 {offsets = [0, 64], sizes = [8, 32], strides = [1, 1]} : vector<8x96xf32> to vector<8x32xf32>
    %108 = vector.extract_strided_slice %93 {offsets = [0, 64], sizes = [8, 32], strides = [1, 1]} : vector<8x96xf32> to vector<8x32xf32>
    %109 = arith.addf %108, %6 : vector<8x32xf32>
    %110 = arith.mulf %105, %109 : vector<8x32xf32>
    %111 = arith.addf %107, %110 : vector<8x32xf32>
    %112 = math.tanh %111 : vector<8x32xf32>
    %cst_29 = arith.constant 1.000000e+00 : f32
    %113 = vector.broadcast %cst_29 : f32 to vector<8x32xf32>
    %114 = arith.subf %113, %106 : vector<8x32xf32>
    %115 = arith.mulf %114, %112 : vector<8x32xf32>
    %116 = arith.mulf %106, %91 : vector<8x32xf32>
    %117 = arith.addf %115, %116 : vector<8x32xf32>
    %c24 = arith.constant 24 : index
    %c0_30 = arith.constant 0 : index
    %118 = vector.load %arg4[%c24, %c0_30] : memref<64x32xf32, #tpu.memory_space<vmem>>, vector<8x32xf32>
    tpu.vector_store %arg4[%c24, %c0_30], %117 {strides = array<i32>} : memref<64x32xf32, #tpu.memory_space<vmem>>, vector<8x32xf32>,
    %cst_31 = arith.constant dense<0.000000e+00> : vector<8x96xf32>
    %119 = tpu.matmul %117, %4, %cst_31 {dimension_numbers = #tpu.dot_dimension_numbers<[1], [0], [0], [1], [0, 0, 1, 1], [], []>} : vector<8x32xf32>, vector<32x96xf32>, vector<8x96xf32> -> vector<8x96xf32>
    %120 = vector.extract_strided_slice %13 {offsets = [32, 0], sizes = [8, 96], strides = [1, 1]} : vector<64x96xf32> to vector<8x96xf32>
    %121 = vector.extract_strided_slice %120 {offsets = [0, 0], sizes = [8, 64], strides = [1, 1]} : vector<8x96xf32> to vector<8x64xf32>
    %122 = vector.extract_strided_slice %119 {offsets = [0, 0], sizes = [8, 64], strides = [1, 1]} : vector<8x96xf32> to vector<8x64xf32>
    %123 = arith.addf %121, %122 : vector<8x64xf32>
    %cst_32 = arith.constant 5.000000e-01 : f32
    %124 = vector.broadcast %cst_32 : f32 to vector<8x64xf32>
    %125 = arith.mulf %124, %123 : vector<8x64xf32>
    %126 = math.tanh %125 : vector<8x64xf32>
    %cst_33 = arith.constant 5.000000e-01 : f32
    %127 = vector.broadcast %cst_33 : f32 to vector<8x64xf32>
    %128 = arith.mulf %127, %126 : vector<8x64xf32>
    %cst_34 = arith.constant 5.000000e-01 : f32
    %129 = vector.broadcast %cst_34 : f32 to vector<8x64xf32>
    %130 = arith.addf %128, %129 : vector<8x64xf32>
    %131 = vector.extract_strided_slice %130 {offsets = [0, 0], sizes = [8, 32], strides = [1, 1]} : vector<8x64xf32> to vector<8x32xf32>
    %132 = vector.extract_strided_slice %130 {offsets = [0, 32], sizes = [8, 32], strides = [1, 1]} : vector<8x64xf32> to vector<8x32xf32>
    %133 = vector.extract_strided_slice %120 {offsets = [0, 64], sizes = [8, 32], strides = [1, 1]} : vector<8x96xf32> to vector<8x32xf32>
    %134 = vector.extract_strided_slice %119 {offsets = [0, 64], sizes = [8, 32], strides = [1, 1]} : vector<8x96xf32> to vector<8x32xf32>
    %135 = arith.addf %134, %6 : vector<8x32xf32>
    %136 = arith.mulf %131, %135 : vector<8x32xf32>
    %137 = arith.addf %133, %136 : vector<8x32xf32>
    %138 = math.tanh %137 : vector<8x32xf32>
    %cst_35 = arith.constant 1.000000e+00 : f32
    %139 = vector.broadcast %cst_35 : f32 to vector<8x32xf32>
    %140 = arith.subf %139, %132 : vector<8x32xf32>
    %141 = arith.mulf %140, %138 : vector<8x32xf32>
    %142 = arith.mulf %132, %117 : vector<8x32xf32>
    %143 = arith.addf %141, %142 : vector<8x32xf32>
    %c32 = arith.constant 32 : index
    %c0_36 = arith.constant 0 : index
    %144 = vector.load %arg4[%c32, %c0_36] : memref<64x32xf32, #tpu.memory_space<vmem>>, vector<8x32xf32>
    tpu.vector_store %arg4[%c32, %c0_36], %143 {strides = array<i32>} : memref<64x32xf32, #tpu.memory_space<vmem>>, vector<8x32xf32>,
    %cst_37 = arith.constant dense<0.000000e+00> : vector<8x96xf32>
    %145 = tpu.matmul %143, %4, %cst_37 {dimension_numbers = #tpu.dot_dimension_numbers<[1], [0], [0], [1], [0, 0, 1, 1], [], []>} : vector<8x32xf32>, vector<32x96xf32>, vector<8x96xf32> -> vector<8x96xf32>
    %146 = vector.extract_strided_slice %13 {offsets = [40, 0], sizes = [8, 96], strides = [1, 1]} : vector<64x96xf32> to vector<8x96xf32>
    %147 = vector.extract_strided_slice %146 {offsets = [0, 0], sizes = [8, 64], strides = [1, 1]} : vector<8x96xf32> to vector<8x64xf32>
    %148 = vector.extract_strided_slice %145 {offsets = [0, 0], sizes = [8, 64], strides = [1, 1]} : vector<8x96xf32> to vector<8x64xf32>
    %149 = arith.addf %147, %148 : vector<8x64xf32>
    %cst_38 = arith.constant 5.000000e-01 : f32
    %150 = vector.broadcast %cst_38 : f32 to vector<8x64xf32>
    %151 = arith.mulf %150, %149 : vector<8x64xf32>
    %152 = math.tanh %151 : vector<8x64xf32>
    %cst_39 = arith.constant 5.000000e-01 : f32
    %153 = vector.broadcast %cst_39 : f32 to vector<8x64xf32>
    %154 = arith.mulf %153, %152 : vector<8x64xf32>
    %cst_40 = arith.constant 5.000000e-01 : f32
    %155 = vector.broadcast %cst_40 : f32 to vector<8x64xf32>
    %156 = arith.addf %154, %155 : vector<8x64xf32>
    %157 = vector.extract_strided_slice %156 {offsets = [0, 0], sizes = [8, 32], strides = [1, 1]} : vector<8x64xf32> to vector<8x32xf32>
    %158 = vector.extract_strided_slice %156 {offsets = [0, 32], sizes = [8, 32], strides = [1, 1]} : vector<8x64xf32> to vector<8x32xf32>
    %159 = vector.extract_strided_slice %146 {offsets = [0, 64], sizes = [8, 32], strides = [1, 1]} : vector<8x96xf32> to vector<8x32xf32>
    %160 = vector.extract_strided_slice %145 {offsets = [0, 64], sizes = [8, 32], strides = [1, 1]} : vector<8x96xf32> to vector<8x32xf32>
    %161 = arith.addf %160, %6 : vector<8x32xf32>
    %162 = arith.mulf %157, %161 : vector<8x32xf32>
    %163 = arith.addf %159, %162 : vector<8x32xf32>
    %164 = math.tanh %163 : vector<8x32xf32>
    %cst_41 = arith.constant 1.000000e+00 : f32
    %165 = vector.broadcast %cst_41 : f32 to vector<8x32xf32>
    %166 = arith.subf %165, %158 : vector<8x32xf32>
    %167 = arith.mulf %166, %164 : vector<8x32xf32>
    %168 = arith.mulf %158, %143 : vector<8x32xf32>
    %169 = arith.addf %167, %168 : vector<8x32xf32>
    %c40 = arith.constant 40 : index
    %c0_42 = arith.constant 0 : index
    %170 = vector.load %arg4[%c40, %c0_42] : memref<64x32xf32, #tpu.memory_space<vmem>>, vector<8x32xf32>
    tpu.vector_store %arg4[%c40, %c0_42], %169 {strides = array<i32>} : memref<64x32xf32, #tpu.memory_space<vmem>>, vector<8x32xf32>,
    %cst_43 = arith.constant dense<0.000000e+00> : vector<8x96xf32>
    %171 = tpu.matmul %169, %4, %cst_43 {dimension_numbers = #tpu.dot_dimension_numbers<[1], [0], [0], [1], [0, 0, 1, 1], [], []>} : vector<8x32xf32>, vector<32x96xf32>, vector<8x96xf32> -> vector<8x96xf32>
    %172 = vector.extract_strided_slice %13 {offsets = [48, 0], sizes = [8, 96], strides = [1, 1]} : vector<64x96xf32> to vector<8x96xf32>
    %173 = vector.extract_strided_slice %172 {offsets = [0, 0], sizes = [8, 64], strides = [1, 1]} : vector<8x96xf32> to vector<8x64xf32>
    %174 = vector.extract_strided_slice %171 {offsets = [0, 0], sizes = [8, 64], strides = [1, 1]} : vector<8x96xf32> to vector<8x64xf32>
    %175 = arith.addf %173, %174 : vector<8x64xf32>
    %cst_44 = arith.constant 5.000000e-01 : f32
    %176 = vector.broadcast %cst_44 : f32 to vector<8x64xf32>
    %177 = arith.mulf %176, %175 : vector<8x64xf32>
    %178 = math.tanh %177 : vector<8x64xf32>
    %cst_45 = arith.constant 5.000000e-01 : f32
    %179 = vector.broadcast %cst_45 : f32 to vector<8x64xf32>
    %180 = arith.mulf %179, %178 : vector<8x64xf32>
    %cst_46 = arith.constant 5.000000e-01 : f32
    %181 = vector.broadcast %cst_46 : f32 to vector<8x64xf32>
    %182 = arith.addf %180, %181 : vector<8x64xf32>
    %183 = vector.extract_strided_slice %182 {offsets = [0, 0], sizes = [8, 32], strides = [1, 1]} : vector<8x64xf32> to vector<8x32xf32>
    %184 = vector.extract_strided_slice %182 {offsets = [0, 32], sizes = [8, 32], strides = [1, 1]} : vector<8x64xf32> to vector<8x32xf32>
    %185 = vector.extract_strided_slice %172 {offsets = [0, 64], sizes = [8, 32], strides = [1, 1]} : vector<8x96xf32> to vector<8x32xf32>
    %186 = vector.extract_strided_slice %171 {offsets = [0, 64], sizes = [8, 32], strides = [1, 1]} : vector<8x96xf32> to vector<8x32xf32>
    %187 = arith.addf %186, %6 : vector<8x32xf32>
    %188 = arith.mulf %183, %187 : vector<8x32xf32>
    %189 = arith.addf %185, %188 : vector<8x32xf32>
    %190 = math.tanh %189 : vector<8x32xf32>
    %cst_47 = arith.constant 1.000000e+00 : f32
    %191 = vector.broadcast %cst_47 : f32 to vector<8x32xf32>
    %192 = arith.subf %191, %184 : vector<8x32xf32>
    %193 = arith.mulf %192, %190 : vector<8x32xf32>
    %194 = arith.mulf %184, %169 : vector<8x32xf32>
    %195 = arith.addf %193, %194 : vector<8x32xf32>
    %c48 = arith.constant 48 : index
    %c0_48 = arith.constant 0 : index
    %196 = vector.load %arg4[%c48, %c0_48] : memref<64x32xf32, #tpu.memory_space<vmem>>, vector<8x32xf32>
    tpu.vector_store %arg4[%c48, %c0_48], %195 {strides = array<i32>} : memref<64x32xf32, #tpu.memory_space<vmem>>, vector<8x32xf32>,
    %cst_49 = arith.constant dense<0.000000e+00> : vector<8x96xf32>
    %197 = tpu.matmul %195, %4, %cst_49 {dimension_numbers = #tpu.dot_dimension_numbers<[1], [0], [0], [1], [0, 0, 1, 1], [], []>} : vector<8x32xf32>, vector<32x96xf32>, vector<8x96xf32> -> vector<8x96xf32>
    %198 = vector.extract_strided_slice %13 {offsets = [56, 0], sizes = [8, 96], strides = [1, 1]} : vector<64x96xf32> to vector<8x96xf32>
    %199 = vector.extract_strided_slice %198 {offsets = [0, 0], sizes = [8, 64], strides = [1, 1]} : vector<8x96xf32> to vector<8x64xf32>
    %200 = vector.extract_strided_slice %197 {offsets = [0, 0], sizes = [8, 64], strides = [1, 1]} : vector<8x96xf32> to vector<8x64xf32>
    %201 = arith.addf %199, %200 : vector<8x64xf32>
    %cst_50 = arith.constant 5.000000e-01 : f32
    %202 = vector.broadcast %cst_50 : f32 to vector<8x64xf32>
    %203 = arith.mulf %202, %201 : vector<8x64xf32>
    %204 = math.tanh %203 : vector<8x64xf32>
    %cst_51 = arith.constant 5.000000e-01 : f32
    %205 = vector.broadcast %cst_51 : f32 to vector<8x64xf32>
    %206 = arith.mulf %205, %204 : vector<8x64xf32>
    %cst_52 = arith.constant 5.000000e-01 : f32
    %207 = vector.broadcast %cst_52 : f32 to vector<8x64xf32>
    %208 = arith.addf %206, %207 : vector<8x64xf32>
    %209 = vector.extract_strided_slice %208 {offsets = [0, 0], sizes = [8, 32], strides = [1, 1]} : vector<8x64xf32> to vector<8x32xf32>
    %210 = vector.extract_strided_slice %208 {offsets = [0, 32], sizes = [8, 32], strides = [1, 1]} : vector<8x64xf32> to vector<8x32xf32>
    %211 = vector.extract_strided_slice %198 {offsets = [0, 64], sizes = [8, 32], strides = [1, 1]} : vector<8x96xf32> to vector<8x32xf32>
    %212 = vector.extract_strided_slice %197 {offsets = [0, 64], sizes = [8, 32], strides = [1, 1]} : vector<8x96xf32> to vector<8x32xf32>
    %213 = arith.addf %212, %6 : vector<8x32xf32>
    %214 = arith.mulf %209, %213 : vector<8x32xf32>
    %215 = arith.addf %211, %214 : vector<8x32xf32>
    %216 = math.tanh %215 : vector<8x32xf32>
    %cst_53 = arith.constant 1.000000e+00 : f32
    %217 = vector.broadcast %cst_53 : f32 to vector<8x32xf32>
    %218 = arith.subf %217, %210 : vector<8x32xf32>
    %219 = arith.mulf %218, %216 : vector<8x32xf32>
    %220 = arith.mulf %210, %195 : vector<8x32xf32>
    %221 = arith.addf %219, %220 : vector<8x32xf32>
    %c56 = arith.constant 56 : index
    %c0_54 = arith.constant 0 : index
    %222 = vector.load %arg4[%c56, %c0_54] : memref<64x32xf32, #tpu.memory_space<vmem>>, vector<8x32xf32>
    tpu.vector_store %arg4[%c56, %c0_54], %221 {strides = array<i32>} : memref<64x32xf32, #tpu.memory_space<vmem>>, vector<8x32xf32>,
    %c0_55 = arith.constant 0 : index
    %c0_56 = arith.constant 0 : index
    %223 = vector.load %arg4[%c0_55, %c0_56] : memref<64x32xf32, #tpu.memory_space<vmem>>, vector<64x32xf32>
    %cst_57 = arith.constant dense<0.000000e+00> : vector<64x96xf32>
    %224 = tpu.matmul %223, %7, %cst_57 {dimension_numbers = #tpu.dot_dimension_numbers<[1], [0], [0], [1], [0, 0, 1, 1], [], []>} : vector<64x32xf32>, vector<32x96xf32>, vector<64x96xf32> -> vector<64x96xf32>
    %225 = vector.broadcast %9 : vector<1x96xf32> to vector<64x96xf32>
    %226 = arith.addf %224, %225 : vector<64x96xf32>
    %cst_58 = arith.constant 0.000000e+00 : f32
    %227 = vector.broadcast %cst_58 : f32 to vector<8x32xf32>
    %cst_59 = arith.constant dense<0.000000e+00> : vector<8x96xf32>
    %228 = tpu.matmul %227, %8, %cst_59 {dimension_numbers = #tpu.dot_dimension_numbers<[1], [0], [0], [1], [0, 0, 1, 1], [], []>} : vector<8x32xf32>, vector<32x96xf32>, vector<8x96xf32> -> vector<8x96xf32>
    %229 = vector.extract_strided_slice %226 {offsets = [0, 0], sizes = [8, 96], strides = [1, 1]} : vector<64x96xf32> to vector<8x96xf32>
    %230 = vector.extract_strided_slice %229 {offsets = [0, 0], sizes = [8, 64], strides = [1, 1]} : vector<8x96xf32> to vector<8x64xf32>
    %231 = vector.extract_strided_slice %228 {offsets = [0, 0], sizes = [8, 64], strides = [1, 1]} : vector<8x96xf32> to vector<8x64xf32>
    %232 = arith.addf %230, %231 : vector<8x64xf32>
    %cst_60 = arith.constant 5.000000e-01 : f32
    %233 = vector.broadcast %cst_60 : f32 to vector<8x64xf32>
    %234 = arith.mulf %233, %232 : vector<8x64xf32>
    %235 = math.tanh %234 : vector<8x64xf32>
    %cst_61 = arith.constant 5.000000e-01 : f32
    %236 = vector.broadcast %cst_61 : f32 to vector<8x64xf32>
    %237 = arith.mulf %236, %235 : vector<8x64xf32>
    %cst_62 = arith.constant 5.000000e-01 : f32
    %238 = vector.broadcast %cst_62 : f32 to vector<8x64xf32>
    %239 = arith.addf %237, %238 : vector<8x64xf32>
    %240 = vector.extract_strided_slice %239 {offsets = [0, 0], sizes = [8, 32], strides = [1, 1]} : vector<8x64xf32> to vector<8x32xf32>
    %241 = vector.extract_strided_slice %239 {offsets = [0, 32], sizes = [8, 32], strides = [1, 1]} : vector<8x64xf32> to vector<8x32xf32>
    %242 = vector.extract_strided_slice %229 {offsets = [0, 64], sizes = [8, 32], strides = [1, 1]} : vector<8x96xf32> to vector<8x32xf32>
    %243 = vector.extract_strided_slice %228 {offsets = [0, 64], sizes = [8, 32], strides = [1, 1]} : vector<8x96xf32> to vector<8x32xf32>
    %244 = arith.addf %243, %10 : vector<8x32xf32>
    %245 = arith.mulf %240, %244 : vector<8x32xf32>
    %246 = arith.addf %242, %245 : vector<8x32xf32>
    %247 = math.tanh %246 : vector<8x32xf32>
    %cst_63 = arith.constant 1.000000e+00 : f32
    %248 = vector.broadcast %cst_63 : f32 to vector<8x32xf32>
    %249 = arith.subf %248, %241 : vector<8x32xf32>
    %250 = arith.mulf %249, %247 : vector<8x32xf32>
    %251 = arith.mulf %241, %227 : vector<8x32xf32>
    %252 = arith.addf %250, %251 : vector<8x32xf32>
    %cst_64 = arith.constant dense<0.000000e+00> : vector<8x96xf32>
    %253 = tpu.matmul %252, %8, %cst_64 {dimension_numbers = #tpu.dot_dimension_numbers<[1], [0], [0], [1], [0, 0, 1, 1], [], []>} : vector<8x32xf32>, vector<32x96xf32>, vector<8x96xf32> -> vector<8x96xf32>
    %254 = vector.extract_strided_slice %226 {offsets = [8, 0], sizes = [8, 96], strides = [1, 1]} : vector<64x96xf32> to vector<8x96xf32>
    %255 = vector.extract_strided_slice %254 {offsets = [0, 0], sizes = [8, 64], strides = [1, 1]} : vector<8x96xf32> to vector<8x64xf32>
    %256 = vector.extract_strided_slice %253 {offsets = [0, 0], sizes = [8, 64], strides = [1, 1]} : vector<8x96xf32> to vector<8x64xf32>
    %257 = arith.addf %255, %256 : vector<8x64xf32>
    %cst_65 = arith.constant 5.000000e-01 : f32
    %258 = vector.broadcast %cst_65 : f32 to vector<8x64xf32>
    %259 = arith.mulf %258, %257 : vector<8x64xf32>
    %260 = math.tanh %259 : vector<8x64xf32>
    %cst_66 = arith.constant 5.000000e-01 : f32
    %261 = vector.broadcast %cst_66 : f32 to vector<8x64xf32>
    %262 = arith.mulf %261, %260 : vector<8x64xf32>
    %cst_67 = arith.constant 5.000000e-01 : f32
    %263 = vector.broadcast %cst_67 : f32 to vector<8x64xf32>
    %264 = arith.addf %262, %263 : vector<8x64xf32>
    %265 = vector.extract_strided_slice %264 {offsets = [0, 0], sizes = [8, 32], strides = [1, 1]} : vector<8x64xf32> to vector<8x32xf32>
    %266 = vector.extract_strided_slice %264 {offsets = [0, 32], sizes = [8, 32], strides = [1, 1]} : vector<8x64xf32> to vector<8x32xf32>
    %267 = vector.extract_strided_slice %254 {offsets = [0, 64], sizes = [8, 32], strides = [1, 1]} : vector<8x96xf32> to vector<8x32xf32>
    %268 = vector.extract_strided_slice %253 {offsets = [0, 64], sizes = [8, 32], strides = [1, 1]} : vector<8x96xf32> to vector<8x32xf32>
    %269 = arith.addf %268, %10 : vector<8x32xf32>
    %270 = arith.mulf %265, %269 : vector<8x32xf32>
    %271 = arith.addf %267, %270 : vector<8x32xf32>
    %272 = math.tanh %271 : vector<8x32xf32>
    %cst_68 = arith.constant 1.000000e+00 : f32
    %273 = vector.broadcast %cst_68 : f32 to vector<8x32xf32>
    %274 = arith.subf %273, %266 : vector<8x32xf32>
    %275 = arith.mulf %274, %272 : vector<8x32xf32>
    %276 = arith.mulf %266, %252 : vector<8x32xf32>
    %277 = arith.addf %275, %276 : vector<8x32xf32>
    %cst_69 = arith.constant dense<0.000000e+00> : vector<8x96xf32>
    %278 = tpu.matmul %277, %8, %cst_69 {dimension_numbers = #tpu.dot_dimension_numbers<[1], [0], [0], [1], [0, 0, 1, 1], [], []>} : vector<8x32xf32>, vector<32x96xf32>, vector<8x96xf32> -> vector<8x96xf32>
    %279 = vector.extract_strided_slice %226 {offsets = [16, 0], sizes = [8, 96], strides = [1, 1]} : vector<64x96xf32> to vector<8x96xf32>
    %280 = vector.extract_strided_slice %279 {offsets = [0, 0], sizes = [8, 64], strides = [1, 1]} : vector<8x96xf32> to vector<8x64xf32>
    %281 = vector.extract_strided_slice %278 {offsets = [0, 0], sizes = [8, 64], strides = [1, 1]} : vector<8x96xf32> to vector<8x64xf32>
    %282 = arith.addf %280, %281 : vector<8x64xf32>
    %cst_70 = arith.constant 5.000000e-01 : f32
    %283 = vector.broadcast %cst_70 : f32 to vector<8x64xf32>
    %284 = arith.mulf %283, %282 : vector<8x64xf32>
    %285 = math.tanh %284 : vector<8x64xf32>
    %cst_71 = arith.constant 5.000000e-01 : f32
    %286 = vector.broadcast %cst_71 : f32 to vector<8x64xf32>
    %287 = arith.mulf %286, %285 : vector<8x64xf32>
    %cst_72 = arith.constant 5.000000e-01 : f32
    %288 = vector.broadcast %cst_72 : f32 to vector<8x64xf32>
    %289 = arith.addf %287, %288 : vector<8x64xf32>
    %290 = vector.extract_strided_slice %289 {offsets = [0, 0], sizes = [8, 32], strides = [1, 1]} : vector<8x64xf32> to vector<8x32xf32>
    %291 = vector.extract_strided_slice %289 {offsets = [0, 32], sizes = [8, 32], strides = [1, 1]} : vector<8x64xf32> to vector<8x32xf32>
    %292 = vector.extract_strided_slice %279 {offsets = [0, 64], sizes = [8, 32], strides = [1, 1]} : vector<8x96xf32> to vector<8x32xf32>
    %293 = vector.extract_strided_slice %278 {offsets = [0, 64], sizes = [8, 32], strides = [1, 1]} : vector<8x96xf32> to vector<8x32xf32>
    %294 = arith.addf %293, %10 : vector<8x32xf32>
    %295 = arith.mulf %290, %294 : vector<8x32xf32>
    %296 = arith.addf %292, %295 : vector<8x32xf32>
    %297 = math.tanh %296 : vector<8x32xf32>
    %cst_73 = arith.constant 1.000000e+00 : f32
    %298 = vector.broadcast %cst_73 : f32 to vector<8x32xf32>
    %299 = arith.subf %298, %291 : vector<8x32xf32>
    %300 = arith.mulf %299, %297 : vector<8x32xf32>
    %301 = arith.mulf %291, %277 : vector<8x32xf32>
    %302 = arith.addf %300, %301 : vector<8x32xf32>
    %cst_74 = arith.constant dense<0.000000e+00> : vector<8x96xf32>
    %303 = tpu.matmul %302, %8, %cst_74 {dimension_numbers = #tpu.dot_dimension_numbers<[1], [0], [0], [1], [0, 0, 1, 1], [], []>} : vector<8x32xf32>, vector<32x96xf32>, vector<8x96xf32> -> vector<8x96xf32>
    %304 = vector.extract_strided_slice %226 {offsets = [24, 0], sizes = [8, 96], strides = [1, 1]} : vector<64x96xf32> to vector<8x96xf32>
    %305 = vector.extract_strided_slice %304 {offsets = [0, 0], sizes = [8, 64], strides = [1, 1]} : vector<8x96xf32> to vector<8x64xf32>
    %306 = vector.extract_strided_slice %303 {offsets = [0, 0], sizes = [8, 64], strides = [1, 1]} : vector<8x96xf32> to vector<8x64xf32>
    %307 = arith.addf %305, %306 : vector<8x64xf32>
    %cst_75 = arith.constant 5.000000e-01 : f32
    %308 = vector.broadcast %cst_75 : f32 to vector<8x64xf32>
    %309 = arith.mulf %308, %307 : vector<8x64xf32>
    %310 = math.tanh %309 : vector<8x64xf32>
    %cst_76 = arith.constant 5.000000e-01 : f32
    %311 = vector.broadcast %cst_76 : f32 to vector<8x64xf32>
    %312 = arith.mulf %311, %310 : vector<8x64xf32>
    %cst_77 = arith.constant 5.000000e-01 : f32
    %313 = vector.broadcast %cst_77 : f32 to vector<8x64xf32>
    %314 = arith.addf %312, %313 : vector<8x64xf32>
    %315 = vector.extract_strided_slice %314 {offsets = [0, 0], sizes = [8, 32], strides = [1, 1]} : vector<8x64xf32> to vector<8x32xf32>
    %316 = vector.extract_strided_slice %314 {offsets = [0, 32], sizes = [8, 32], strides = [1, 1]} : vector<8x64xf32> to vector<8x32xf32>
    %317 = vector.extract_strided_slice %304 {offsets = [0, 64], sizes = [8, 32], strides = [1, 1]} : vector<8x96xf32> to vector<8x32xf32>
    %318 = vector.extract_strided_slice %303 {offsets = [0, 64], sizes = [8, 32], strides = [1, 1]} : vector<8x96xf32> to vector<8x32xf32>
    %319 = arith.addf %318, %10 : vector<8x32xf32>
    %320 = arith.mulf %315, %319 : vector<8x32xf32>
    %321 = arith.addf %317, %320 : vector<8x32xf32>
    %322 = math.tanh %321 : vector<8x32xf32>
    %cst_78 = arith.constant 1.000000e+00 : f32
    %323 = vector.broadcast %cst_78 : f32 to vector<8x32xf32>
    %324 = arith.subf %323, %316 : vector<8x32xf32>
    %325 = arith.mulf %324, %322 : vector<8x32xf32>
    %326 = arith.mulf %316, %302 : vector<8x32xf32>
    %327 = arith.addf %325, %326 : vector<8x32xf32>
    %cst_79 = arith.constant dense<0.000000e+00> : vector<8x96xf32>
    %328 = tpu.matmul %327, %8, %cst_79 {dimension_numbers = #tpu.dot_dimension_numbers<[1], [0], [0], [1], [0, 0, 1, 1], [], []>} : vector<8x32xf32>, vector<32x96xf32>, vector<8x96xf32> -> vector<8x96xf32>
    %329 = vector.extract_strided_slice %226 {offsets = [32, 0], sizes = [8, 96], strides = [1, 1]} : vector<64x96xf32> to vector<8x96xf32>
    %330 = vector.extract_strided_slice %329 {offsets = [0, 0], sizes = [8, 64], strides = [1, 1]} : vector<8x96xf32> to vector<8x64xf32>
    %331 = vector.extract_strided_slice %328 {offsets = [0, 0], sizes = [8, 64], strides = [1, 1]} : vector<8x96xf32> to vector<8x64xf32>
    %332 = arith.addf %330, %331 : vector<8x64xf32>
    %cst_80 = arith.constant 5.000000e-01 : f32
    %333 = vector.broadcast %cst_80 : f32 to vector<8x64xf32>
    %334 = arith.mulf %333, %332 : vector<8x64xf32>
    %335 = math.tanh %334 : vector<8x64xf32>
    %cst_81 = arith.constant 5.000000e-01 : f32
    %336 = vector.broadcast %cst_81 : f32 to vector<8x64xf32>
    %337 = arith.mulf %336, %335 : vector<8x64xf32>
    %cst_82 = arith.constant 5.000000e-01 : f32
    %338 = vector.broadcast %cst_82 : f32 to vector<8x64xf32>
    %339 = arith.addf %337, %338 : vector<8x64xf32>
    %340 = vector.extract_strided_slice %339 {offsets = [0, 0], sizes = [8, 32], strides = [1, 1]} : vector<8x64xf32> to vector<8x32xf32>
    %341 = vector.extract_strided_slice %339 {offsets = [0, 32], sizes = [8, 32], strides = [1, 1]} : vector<8x64xf32> to vector<8x32xf32>
    %342 = vector.extract_strided_slice %329 {offsets = [0, 64], sizes = [8, 32], strides = [1, 1]} : vector<8x96xf32> to vector<8x32xf32>
    %343 = vector.extract_strided_slice %328 {offsets = [0, 64], sizes = [8, 32], strides = [1, 1]} : vector<8x96xf32> to vector<8x32xf32>
    %344 = arith.addf %343, %10 : vector<8x32xf32>
    %345 = arith.mulf %340, %344 : vector<8x32xf32>
    %346 = arith.addf %342, %345 : vector<8x32xf32>
    %347 = math.tanh %346 : vector<8x32xf32>
    %cst_83 = arith.constant 1.000000e+00 : f32
    %348 = vector.broadcast %cst_83 : f32 to vector<8x32xf32>
    %349 = arith.subf %348, %341 : vector<8x32xf32>
    %350 = arith.mulf %349, %347 : vector<8x32xf32>
    %351 = arith.mulf %341, %327 : vector<8x32xf32>
    %352 = arith.addf %350, %351 : vector<8x32xf32>
    %cst_84 = arith.constant dense<0.000000e+00> : vector<8x96xf32>
    %353 = tpu.matmul %352, %8, %cst_84 {dimension_numbers = #tpu.dot_dimension_numbers<[1], [0], [0], [1], [0, 0, 1, 1], [], []>} : vector<8x32xf32>, vector<32x96xf32>, vector<8x96xf32> -> vector<8x96xf32>
    %354 = vector.extract_strided_slice %226 {offsets = [40, 0], sizes = [8, 96], strides = [1, 1]} : vector<64x96xf32> to vector<8x96xf32>
    %355 = vector.extract_strided_slice %354 {offsets = [0, 0], sizes = [8, 64], strides = [1, 1]} : vector<8x96xf32> to vector<8x64xf32>
    %356 = vector.extract_strided_slice %353 {offsets = [0, 0], sizes = [8, 64], strides = [1, 1]} : vector<8x96xf32> to vector<8x64xf32>
    %357 = arith.addf %355, %356 : vector<8x64xf32>
    %cst_85 = arith.constant 5.000000e-01 : f32
    %358 = vector.broadcast %cst_85 : f32 to vector<8x64xf32>
    %359 = arith.mulf %358, %357 : vector<8x64xf32>
    %360 = math.tanh %359 : vector<8x64xf32>
    %cst_86 = arith.constant 5.000000e-01 : f32
    %361 = vector.broadcast %cst_86 : f32 to vector<8x64xf32>
    %362 = arith.mulf %361, %360 : vector<8x64xf32>
    %cst_87 = arith.constant 5.000000e-01 : f32
    %363 = vector.broadcast %cst_87 : f32 to vector<8x64xf32>
    %364 = arith.addf %362, %363 : vector<8x64xf32>
    %365 = vector.extract_strided_slice %364 {offsets = [0, 0], sizes = [8, 32], strides = [1, 1]} : vector<8x64xf32> to vector<8x32xf32>
    %366 = vector.extract_strided_slice %364 {offsets = [0, 32], sizes = [8, 32], strides = [1, 1]} : vector<8x64xf32> to vector<8x32xf32>
    %367 = vector.extract_strided_slice %354 {offsets = [0, 64], sizes = [8, 32], strides = [1, 1]} : vector<8x96xf32> to vector<8x32xf32>
    %368 = vector.extract_strided_slice %353 {offsets = [0, 64], sizes = [8, 32], strides = [1, 1]} : vector<8x96xf32> to vector<8x32xf32>
    %369 = arith.addf %368, %10 : vector<8x32xf32>
    %370 = arith.mulf %365, %369 : vector<8x32xf32>
    %371 = arith.addf %367, %370 : vector<8x32xf32>
    %372 = math.tanh %371 : vector<8x32xf32>
    %cst_88 = arith.constant 1.000000e+00 : f32
    %373 = vector.broadcast %cst_88 : f32 to vector<8x32xf32>
    %374 = arith.subf %373, %366 : vector<8x32xf32>
    %375 = arith.mulf %374, %372 : vector<8x32xf32>
    %376 = arith.mulf %366, %352 : vector<8x32xf32>
    %377 = arith.addf %375, %376 : vector<8x32xf32>
    %cst_89 = arith.constant dense<0.000000e+00> : vector<8x96xf32>
    %378 = tpu.matmul %377, %8, %cst_89 {dimension_numbers = #tpu.dot_dimension_numbers<[1], [0], [0], [1], [0, 0, 1, 1], [], []>} : vector<8x32xf32>, vector<32x96xf32>, vector<8x96xf32> -> vector<8x96xf32>
    %379 = vector.extract_strided_slice %226 {offsets = [48, 0], sizes = [8, 96], strides = [1, 1]} : vector<64x96xf32> to vector<8x96xf32>
    %380 = vector.extract_strided_slice %379 {offsets = [0, 0], sizes = [8, 64], strides = [1, 1]} : vector<8x96xf32> to vector<8x64xf32>
    %381 = vector.extract_strided_slice %378 {offsets = [0, 0], sizes = [8, 64], strides = [1, 1]} : vector<8x96xf32> to vector<8x64xf32>
    %382 = arith.addf %380, %381 : vector<8x64xf32>
    %cst_90 = arith.constant 5.000000e-01 : f32
    %383 = vector.broadcast %cst_90 : f32 to vector<8x64xf32>
    %384 = arith.mulf %383, %382 : vector<8x64xf32>
    %385 = math.tanh %384 : vector<8x64xf32>
    %cst_91 = arith.constant 5.000000e-01 : f32
    %386 = vector.broadcast %cst_91 : f32 to vector<8x64xf32>
    %387 = arith.mulf %386, %385 : vector<8x64xf32>
    %cst_92 = arith.constant 5.000000e-01 : f32
    %388 = vector.broadcast %cst_92 : f32 to vector<8x64xf32>
    %389 = arith.addf %387, %388 : vector<8x64xf32>
    %390 = vector.extract_strided_slice %389 {offsets = [0, 0], sizes = [8, 32], strides = [1, 1]} : vector<8x64xf32> to vector<8x32xf32>
    %391 = vector.extract_strided_slice %389 {offsets = [0, 32], sizes = [8, 32], strides = [1, 1]} : vector<8x64xf32> to vector<8x32xf32>
    %392 = vector.extract_strided_slice %379 {offsets = [0, 64], sizes = [8, 32], strides = [1, 1]} : vector<8x96xf32> to vector<8x32xf32>
    %393 = vector.extract_strided_slice %378 {offsets = [0, 64], sizes = [8, 32], strides = [1, 1]} : vector<8x96xf32> to vector<8x32xf32>
    %394 = arith.addf %393, %10 : vector<8x32xf32>
    %395 = arith.mulf %390, %394 : vector<8x32xf32>
    %396 = arith.addf %392, %395 : vector<8x32xf32>
    %397 = math.tanh %396 : vector<8x32xf32>
    %cst_93 = arith.constant 1.000000e+00 : f32
    %398 = vector.broadcast %cst_93 : f32 to vector<8x32xf32>
    %399 = arith.subf %398, %391 : vector<8x32xf32>
    %400 = arith.mulf %399, %397 : vector<8x32xf32>
    %401 = arith.mulf %391, %377 : vector<8x32xf32>
    %402 = arith.addf %400, %401 : vector<8x32xf32>
    %cst_94 = arith.constant dense<0.000000e+00> : vector<8x96xf32>
    %403 = tpu.matmul %402, %8, %cst_94 {dimension_numbers = #tpu.dot_dimension_numbers<[1], [0], [0], [1], [0, 0, 1, 1], [], []>} : vector<8x32xf32>, vector<32x96xf32>, vector<8x96xf32> -> vector<8x96xf32>
    %404 = vector.extract_strided_slice %226 {offsets = [56, 0], sizes = [8, 96], strides = [1, 1]} : vector<64x96xf32> to vector<8x96xf32>
    %405 = vector.extract_strided_slice %404 {offsets = [0, 0], sizes = [8, 64], strides = [1, 1]} : vector<8x96xf32> to vector<8x64xf32>
    %406 = vector.extract_strided_slice %403 {offsets = [0, 0], sizes = [8, 64], strides = [1, 1]} : vector<8x96xf32> to vector<8x64xf32>
    %407 = arith.addf %405, %406 : vector<8x64xf32>
    %cst_95 = arith.constant 5.000000e-01 : f32
    %408 = vector.broadcast %cst_95 : f32 to vector<8x64xf32>
    %409 = arith.mulf %408, %407 : vector<8x64xf32>
    %410 = math.tanh %409 : vector<8x64xf32>
    %cst_96 = arith.constant 5.000000e-01 : f32
    %411 = vector.broadcast %cst_96 : f32 to vector<8x64xf32>
    %412 = arith.mulf %411, %410 : vector<8x64xf32>
    %cst_97 = arith.constant 5.000000e-01 : f32
    %413 = vector.broadcast %cst_97 : f32 to vector<8x64xf32>
    %414 = arith.addf %412, %413 : vector<8x64xf32>
    %415 = vector.extract_strided_slice %414 {offsets = [0, 0], sizes = [8, 32], strides = [1, 1]} : vector<8x64xf32> to vector<8x32xf32>
    %416 = vector.extract_strided_slice %414 {offsets = [0, 32], sizes = [8, 32], strides = [1, 1]} : vector<8x64xf32> to vector<8x32xf32>
    %417 = vector.extract_strided_slice %404 {offsets = [0, 64], sizes = [8, 32], strides = [1, 1]} : vector<8x96xf32> to vector<8x32xf32>
    %418 = vector.extract_strided_slice %403 {offsets = [0, 64], sizes = [8, 32], strides = [1, 1]} : vector<8x96xf32> to vector<8x32xf32>
    %419 = arith.addf %418, %10 : vector<8x32xf32>
    %420 = arith.mulf %415, %419 : vector<8x32xf32>
    %421 = arith.addf %417, %420 : vector<8x32xf32>
    %422 = math.tanh %421 : vector<8x32xf32>
    %cst_98 = arith.constant 1.000000e+00 : f32
    %423 = vector.broadcast %cst_98 : f32 to vector<8x32xf32>
    %424 = arith.subf %423, %416 : vector<8x32xf32>
    %425 = arith.mulf %424, %422 : vector<8x32xf32>
    %426 = arith.mulf %416, %402 : vector<8x32xf32>
    %427 = arith.addf %425, %426 : vector<8x32xf32>
    %428 = vector.extract_strided_slice %2 {offsets = [0, 0], sizes = [32, 64], strides = [1, 1]} : vector<184x64xf32> to vector<32x64xf32>
    %429 = vector.extract_strided_slice %2 {offsets = [32, 0], sizes = [8, 64], strides = [1, 1]} : vector<184x64xf32> to vector<8x64xf32>
    %430 = vector.extract_strided_slice %2 {offsets = [40, 0], sizes = [64, 64], strides = [1, 1]} : vector<184x64xf32> to vector<64x64xf32>
    %431 = vector.extract_strided_slice %2 {offsets = [104, 0], sizes = [8, 64], strides = [1, 1]} : vector<184x64xf32> to vector<8x64xf32>
    %432 = vector.extract_strided_slice %2 {offsets = [112, 0], sizes = [64, 64], strides = [1, 1]} : vector<184x64xf32> to vector<64x64xf32>
    %433 = vector.extract_strided_slice %2 {offsets = [176, 0], sizes = [8, 64], strides = [1, 1]} : vector<184x64xf32> to vector<8x64xf32>
    %cst_99 = arith.constant dense<0.000000e+00> : vector<8x64xf32>
    %434 = tpu.matmul %427, %428, %cst_99 {dimension_numbers = #tpu.dot_dimension_numbers<[1], [0], [0], [1], [0, 0, 1, 1], [], []>} : vector<8x32xf32>, vector<32x64xf32>, vector<8x64xf32> -> vector<8x64xf32>
    %435 = arith.addf %434, %429 : vector<8x64xf32>
    %cst_100 = arith.constant 0.000000e+00 : f32
    %436 = vector.broadcast %cst_100 : f32 to vector<8x64xf32>
    %437 = arith.maximumf %435, %436 : vector<8x64xf32>
    %cst_101 = arith.constant dense<0.000000e+00> : vector<8x64xf32>
    %438 = tpu.matmul %437, %430, %cst_101 {dimension_numbers = #tpu.dot_dimension_numbers<[1], [0], [0], [1], [0, 0, 1, 1], [], []>} : vector<8x64xf32>, vector<64x64xf32>, vector<8x64xf32> -> vector<8x64xf32>
    %439 = arith.addf %438, %431 : vector<8x64xf32>
    %cst_102 = arith.constant 0.000000e+00 : f32
    %440 = vector.broadcast %cst_102 : f32 to vector<8x64xf32>
    %441 = arith.maximumf %439, %440 : vector<8x64xf32>
    %cst_103 = arith.constant dense<0.000000e+00> : vector<8x64xf32>
    %442 = tpu.matmul %441, %432, %cst_103 {dimension_numbers = #tpu.dot_dimension_numbers<[1], [0], [0], [1], [0, 0, 1, 1], [], []>} : vector<8x64xf32>, vector<64x64xf32>, vector<8x64xf32> -> vector<8x64xf32>
    %443 = arith.addf %442, %433 : vector<8x64xf32>
    %c0_104 = arith.constant 0 : index
    %c0_105 = arith.constant 0 : index
    %444 = vector.load %arg3[%c0_104, %c0_105] : memref<8x64xf32, #tpu.memory_space<vmem>>, vector<8x64xf32>
    tpu.vector_store %arg3[%c0_104, %c0_105], %443 {strides = array<i32>} : memref<8x64xf32, #tpu.memory_space<vmem>>, vector<8x64xf32>,
    return
  }
}

</mosaic_0001>

<llo_original>
// kernel: duel_dqn_rnn.1
$region0: #{duel_dqn_rnn.1}
  #allocation0 [shape = 'u32[]', space=smem, size = 0x4, offset = 0x4, fixed_abs, tag = 'smem constant byte address 0x4 - core index']
  #allocation1 [shape = 'u32[72,128]{1,0:T(1,128)}', space=vmem, size = 0x9000, scoped, tag = 'internal scratch']
  #allocation2 [shape = 'f32[64,32]{1,0:T(8,128)}', space=vmem, size = 0x8000, scoped, tag = 'scratch operand']
  %s0 = inlined_call_operand.vmem [shape: f32[64,16], index: 0, kind: input, shape index: {}]
  %s1 = inlined_call_operand.vmem [shape: f32[144,96], index: 1, kind: input, shape index: {}]
  %s2 = inlined_call_operand.vmem [shape: f32[184,64], index: 2, kind: input, shape index: {}]
  %s3 = inlined_call_operand.vmem [shape: f32[8,64], index: 3, kind: output, shape index: {}]
  %s4 = sld [smem:[#allocation0]]
  $region22: #{duel_dqn_rnn.1} parent=0
    _
  %s6 = ssub.s32 1, %s4
  %s7 = scalar_select 0, %s6, %s4
  // Predicated region
  $region2: #{duel_dqn_rnn.1} parent=0 // pred_check
    _
  $region3: #{duel_dqn_rnn.1} parent=0 // pred_check_branch
    %9 = sbr.rel (0) target = $region5
  $region4: #{duel_dqn_rnn.1} parent=0 // pred_region
    _
  $region5: #{duel_dqn_rnn.1} parent=0 // pred_fallthru
    _
  // Predicated region
  $region6: #{duel_dqn_rnn.1} parent=0 // pred_check
    _
  $region7: #{duel_dqn_rnn.1} parent=0 // pred_check_branch
    %11 = sbr.rel (0) target = $region9
  $region8: #{duel_dqn_rnn.1} parent=0 // pred_region
    _
  $region9: #{duel_dqn_rnn.1} parent=0 // pred_fallthru
    _
  // Predicated region
  $region10: #{duel_dqn_rnn.1} parent=0 // pred_check
    _
  $region11: #{duel_dqn_rnn.1} parent=0 // pred_check_branch
    %13 = sbr.rel (0) target = $region13
  $region12: #{duel_dqn_rnn.1} parent=0 // pred_region
    _
  $region13: #{duel_dqn_rnn.1} parent=0 // pred_fallthru
    _
  %v14 = vld [vmem:[%s0] sm:$0xff]
  %v15 = vld [vmem:[%s0 + $0x8] sm:$0xff]
  %v16 = vld [vmem:[%s0 + $0x10] sm:$0xff]
  %v17 = vld [vmem:[%s0 + $0x18] sm:$0xff]
  %v18 = vld [vmem:[%s0 + $0x20] sm:$0xff]
  %v19 = vld [vmem:[%s0 + $0x28] sm:$0xff]
  %v20 = vld [vmem:[%s0 + $0x30] sm:$0xff]
  %v21 = vld [vmem:[%s0 + $0x38] sm:$0xff]
  %v22 = vld [vmem:[%s1] sm:$0xff]
  %v23 = vld [vmem:[%s1 + $0x8] sm:$0xff]
  %v24 = vld [vmem:[%s1 + $0x10] sm:$0xff]
  %v25 = vld [vmem:[%s1 + $0x18] sm:$0xff]
  %v26 = vld [vmem:[%s1 + $0x20] sm:$0xff]
  %v27 = vld [vmem:[%s1 + $0x28] sm:$0xff]
  %v28 = vld [vmem:[%s1 + $0x30] sm:$0xff]
  %v29 = vld [vmem:[%s1 + $0x38] sm:$0xff]
  %v30 = vld [vmem:[%s1 + $0x40] sm:$0xff]
  %v31 = vld [vmem:[%s1 + $0x48] sm:$0xff]
  %v32 = vld [vmem:[%s1 + $0x50] sm:$0xff]
  %v33 = vld [vmem:[%s1 + $0x58] sm:$0xff]
  %v34 = vld [vmem:[%s1 + $0x60] sm:$0xff]
  %v35 = vld [vmem:[%s1 + $0x68] sm:$0xff]
  %v36 = vld [vmem:[%s1 + $0x70] sm:$0xff]
  %v37 = vld [vmem:[%s1 + $0x78] sm:$0xff]
  %v38 = vld [vmem:[%s1 + $0x80] sm:$0xff]
  %v39 = vld [vmem:[%s1 + $0x88] sm:$0xff]
  %v40 = vld [vmem:[%s2] sm:$0xff]
  %v41 = vld [vmem:[%s2 + $0x8] sm:$0xff]
  %v42 = vld [vmem:[%s2 + $0x10] sm:$0xff]
  %v43 = vld [vmem:[%s2 + $0x18] sm:$0xff]
  %v44 = vld [vmem:[%s2 + $0x20] sm:$0xff]
  %v45 = vld [vmem:[%s2 + $0x28] sm:$0xff]
  %v46 = vld [vmem:[%s2 + $0x30] sm:$0xff]
  %v47 = vld [vmem:[%s2 + $0x38] sm:$0xff]
  %v48 = vld [vmem:[%s2 + $0x40] sm:$0xff]
  %v49 = vld [vmem:[%s2 + $0x48] sm:$0xff]
  %v50 = vld [vmem:[%s2 + $0x50] sm:$0xff]
  %v51 = vld [vmem:[%s2 + $0x58] sm:$0xff]
  %v52 = vld [vmem:[%s2 + $0x60] sm:$0xff]
  %v53 = vld [vmem:[%s2 + $0x68] sm:$0xff]
  %v54 = vld [vmem:[%s2 + $0x70] sm:$0xff]
  %v55 = vld [vmem:[%s2 + $0x78] sm:$0xff]
  %v56 = vld [vmem:[%s2 + $0x80] sm:$0xff]
  %v57 = vld [vmem:[%s2 + $0x88] sm:$0xff]
  %v58 = vld [vmem:[%s2 + $0x90] sm:$0xff]
  %v59 = vld [vmem:[%s2 + $0x98] sm:$0xff]
  %v60 = vld [vmem:[%s2 + $0xa0] sm:$0xff]
  %v61 = vld [vmem:[%s2 + $0xa8] sm:$0xff]
  %v62 = vld [vmem:[%s2 + $0xb0] sm:$0xff]
  %v63 = vperm.slane %v28, 0
  %vm64 = vcmask 130048
  %v66 = vsel %vm64, %v14, 0
  %v69 = vsel %vm64, %v15, 0
  %v72 = vsel %vm64, %v16, 0
  %v75 = vsel %vm64, %v17, 0
  %v78 = vsel %vm64, %v18, 0
  %v81 = vsel %vm64, %v19, 0
  %v84 = vsel %vm64, %v20, 0
  %v87 = vsel %vm64, %v21, 0
  %89 = vmatpush.msra.mxu0 0.0
  %90 = vmatpush.msra.mxu0 0.0
  %91 = vmatpush.msra.mxu0 0.0
  %92 = vmatpush.msra.mxu0 0.0
  %93 = vmatpush.msra.mxu0 0.0
  %94 = vmatpush.msra.mxu0 0.0
  %95 = vmatpush.msra.mxu0 0.0
  %96 = vmatpush.msra.mxu0 0.0
  %97 = vmatpush.msra.mxu0 0.0
  %98 = vmatpush.msra.mxu0 0.0
  %99 = vmatpush.msra.mxu0 0.0
  %100 = vmatpush.msra.mxu0 0.0
  %101 = vmatpush.msra.mxu0 0.0
  %102 = vmatpush.msra.mxu0 0.0
  %103 = vmatpush.msra.mxu0 %v23
  %104 = vmatpush.msra.mxu0 %v22
  %105 = vmatmul.f32.gmra.mxu0 %v66
  %v106 = vpop.f32.mrf.mxu0
  %v107 = vadd.f32 %v63, %v106
  %108 = vmatmul.f32.gmra.mxu0 %v69
  %v109 = vpop.f32.mrf.mxu0
  %v110 = vadd.f32 %v63, %v109
  %111 = vmatmul.f32.gmra.mxu0 %v72
  %v112 = vpop.f32.mrf.mxu0
  %v113 = vadd.f32 %v63, %v112
  %114 = vmatmul.f32.gmra.mxu0 %v75
  %v115 = vpop.f32.mrf.mxu0
  %v116 = vadd.f32 %v63, %v115
  %117 = vmatmul.f32.gmra.mxu0 %v78
  %v118 = vpop.f32.mrf.mxu0
  %v119 = vadd.f32 %v63, %v118
  %120 = vmatmul.f32.gmra.mxu0 %v81
  %v121 = vpop.f32.mrf.mxu0
  %v122 = vadd.f32 %v63, %v121
  %123 = vmatmul.f32.gmra.mxu0 %v84
  %v124 = vpop.f32.mrf.mxu0
  %v125 = vadd.f32 %v63, %v124
  %126 = vmatmul.f32.gmra.mxu0 %v87
  %v127 = vpop.f32.mrf.mxu0
  %v128 = vadd.f32 %v63, %v127
  %129 = vdwg.mxu0
  %vm130 = vcmask 261120
  %v132 = vsel %vm130, 0.0, 0
  %134 = vmatpush.msra.mxu0 0.0
  %135 = vmatpush.msra.mxu0 0.0
  %136 = vmatpush.msra.mxu0 0.0
  %137 = vmatpush.msra.mxu0 0.0
  %138 = vmatpush.msra.mxu0 0.0
  %139 = vmatpush.msra.mxu0 0.0
  %140 = vmatpush.msra.mxu0 0.0
  %141 = vmatpush.msra.mxu0 0.0
  %142 = vmatpush.msra.mxu0 0.0
  %143 = vmatpush.msra.mxu0 0.0
  %144 = vmatpush.msra.mxu0 0.0
  %145 = vmatpush.msra.mxu0 0.0
  %146 = vmatpush.msra.mxu0 %v27
  %147 = vmatpush.msra.mxu0 %v26
  %148 = vmatpush.msra.mxu0 %v25
  %149 = vmatpush.msra.mxu0 %v24
  %150 = vmatmul.f32.gmra.mxu0 %v132
  %v151 = vpop.f32.mrf.mxu0
  %v152 = vadd.f32 0.0, %v151
  %153 = vdwg.mxu0
  %v154 = vadd.f32 %v107, %v152
  %v155 = vmul.f32 %v154, 0.5
  %v156 = vtanh.pop %v155
  %v157 = vmul.f32 %v156, 0.5
  %v158 = vadd.f32 %v157, 0.5
  %160 = vrot.lane.b32.xlu0 %v29, 64
  %v161 = vpop.permute.xlu0 %160
  %v163 = vadd.f32 %v152, %v161
  %165 = vrot.lane.b32.xlu0 %v163, 64
  %v166 = vpop.permute.xlu0 %165
  %v168 = vmul.f32 %v158, %v166
  %170 = vrot.lane.b32.xlu0 %v168, 64
  %v171 = vpop.permute.xlu0 %170
  %v173 = vadd.f32 %v107, %v171
  %v174 = vtanh.pop %v173
  %v175 = vsub.f32 1.0, %v158
  %177 = vrot.lane.b32.xlu0 %v174, 96
  %v178 = vpop.permute.xlu0 %177
  %v180 = vmul.f32 %v175, %v178
  %v181 = vmul.f32 %v158, 0.0
  %v182 = vadd.f32 %v180, %v181
  %184 = vrot.lane.b32.xlu0 %v182, 96
  %v185 = vpop.permute.xlu0 %184
  %187 = vst.msk [vmem:[#allocation2] sm:$0xff] %vm130, %v185
  %v188 = vsel %vm130, %v185, 0
  %190 = vmatpush.msra.mxu0 0.0
  %191 = vmatpush.msra.mxu0 0.0
  %192 = vmatpush.msra.mxu0 0.0
  %193 = vmatpush.msra.mxu0 0.0
  %194 = vmatpush.msra.mxu0 0.0
  %195 = vmatpush.msra.mxu0 0.0
  %196 = vmatpush.msra.mxu0 0.0
  %197 = vmatpush.msra.mxu0 0.0
  %198 = vmatpush.msra.mxu0 0.0
  %199 = vmatpush.msra.mxu0 0.0
  %200 = vmatpush.msra.mxu0 0.0
  %201 = vmatpush.msra.mxu0 0.0
  %202 = vmatpush.msra.mxu0 %v27
  %203 = vmatpush.msra.mxu0 %v26
  %204 = vmatpush.msra.mxu0 %v25
  %205 = vmatpush.msra.mxu0 %v24
  %206 = vmatmul.f32.gmra.mxu0 %v188
  %v207 = vpop.f32.mrf.mxu0
  %v208 = vadd.f32 0.0, %v207
  %209 = vdwg.mxu0
  %v210 = vadd.f32 %v110, %v208
  %v211 = vmul.f32 %v210, 0.5
  %v212 = vtanh.pop %v211
  %v213 = vmul.f32 %v212, 0.5
  %v214 = vadd.f32 %v213, 0.5
  %v215 = vadd.f32 %v208, %v161
  %217 = vrot.lane.b32.xlu0 %v215, 64
  %v218 = vpop.permute.xlu0 %217
  %v220 = vmul.f32 %v214, %v218
  %222 = vrot.lane.b32.xlu0 %v220, 64
  %v223 = vpop.permute.xlu0 %222
  %v225 = vadd.f32 %v110, %v223
  %v226 = vtanh.pop %v225
  %v227 = vsub.f32 1.0, %v214
  %229 = vrot.lane.b32.xlu0 %v226, 96
  %v230 = vpop.permute.xlu0 %229
  %v232 = vmul.f32 %v227, %v230
  %v233 = vmul.f32 %v214, %v182
  %v234 = vadd.f32 %v232, %v233
  %236 = vrot.lane.b32.xlu0 %v234, 96
  %v237 = vpop.permute.xlu0 %236
  %239 = vst.msk [vmem:[#allocation2 + $0x8] sm:$0xff] %vm130, %v237
  %v240 = vsel %vm130, %v237, 0
  %242 = vmatpush.msra.mxu0 0.0
  %243 = vmatpush.msra.mxu0 0.0
  %244 = vmatpush.msra.mxu0 0.0
  %245 = vmatpush.msra.mxu0 0.0
  %246 = vmatpush.msra.mxu0 0.0
  %247 = vmatpush.msra.mxu0 0.0
  %248 = vmatpush.msra.mxu0 0.0
  %249 = vmatpush.msra.mxu0 0.0
  %250 = vmatpush.msra.mxu0 0.0
  %251 = vmatpush.msra.mxu0 0.0
  %252 = vmatpush.msra.mxu0 0.0
  %253 = vmatpush.msra.mxu0 0.0
  %254 = vmatpush.msra.mxu0 %v27
  %255 = vmatpush.msra.mxu0 %v26
  %256 = vmatpush.msra.mxu0 %v25
  %257 = vmatpush.msra.mxu0 %v24
  %258 = vmatmul.f32.gmra.mxu0 %v240
  %v259 = vpop.f32.mrf.mxu0
  %v260 = vadd.f32 0.0, %v259
  %261 = vdwg.mxu0
  %v262 = vadd.f32 %v113, %v260
  %v263 = vmul.f32 %v262, 0.5
  %v264 = vtanh.pop %v263
  %v265 = vmul.f32 %v264, 0.5
  %v266 = vadd.f32 %v265, 0.5
  %v267 = vadd.f32 %v260, %v161
  %269 = vrot.lane.b32.xlu0 %v267, 64
  %v270 = vpop.permute.xlu0 %269
  %v272 = vmul.f32 %v266, %v270
  %274 = vrot.lane.b32.xlu0 %v272, 64
  %v275 = vpop.permute.xlu0 %274
  %v277 = vadd.f32 %v113, %v275
  %v278 = vtanh.pop %v277
  %v279 = vsub.f32 1.0, %v266
  %281 = vrot.lane.b32.xlu0 %v278, 96
  %v282 = vpop.permute.xlu0 %281
  %v284 = vmul.f32 %v279, %v282
  %v285 = vmul.f32 %v266, %v234
  %v286 = vadd.f32 %v284, %v285
  %288 = vrot.lane.b32.xlu0 %v286, 96
  %v289 = vpop.permute.xlu0 %288
  %291 = vst.msk [vmem:[#allocation2 + $0x10] sm:$0xff] %vm130, %v289
  %v292 = vsel %vm130, %v289, 0
  %294 = vmatpush.msra.mxu0 0.0
  %295 = vmatpush.msra.mxu0 0.0
  %296 = vmatpush.msra.mxu0 0.0
  %297 = vmatpush.msra.mxu0 0.0
  %298 = vmatpush.msra.mxu0 0.0
  %299 = vmatpush.msra.mxu0 0.0
  %300 = vmatpush.msra.mxu0 0.0
  %301 = vmatpush.msra.mxu0 0.0
  %302 = vmatpush.msra.mxu0 0.0
  %303 = vmatpush.msra.mxu0 0.0
  %304 = vmatpush.msra.mxu0 0.0
  %305 = vmatpush.msra.mxu0 0.0
  %306 = vmatpush.msra.mxu0 %v27
  %307 = vmatpush.msra.mxu0 %v26
  %308 = vmatpush.msra.mxu0 %v25
  %309 = vmatpush.msra.mxu0 %v24
  %310 = vmatmul.f32.gmra.mxu0 %v292
  %v311 = vpop.f32.mrf.mxu0
  %v312 = vadd.f32 0.0, %v311
  %313 = vdwg.mxu0
  %v314 = vadd.f32 %v116, %v312
  %v315 = vmul.f32 %v314, 0.5
  %v316 = vtanh.pop %v315
  %v317 = vmul.f32 %v316, 0.5
  %v318 = vadd.f32 %v317, 0.5
  %v319 = vadd.f32 %v312, %v161
  %321 = vrot.lane.b32.xlu0 %v319, 64
  %v322 = vpop.permute.xlu0 %321
  %v324 = vmul.f32 %v318, %v322
  %326 = vrot.lane.b32.xlu0 %v324, 64
  %v327 = vpop.permute.xlu0 %326
  %v329 = vadd.f32 %v116, %v327
  %v330 = vtanh.pop %v329
  %v331 = vsub.f32 1.0, %v318
  %333 = vrot.lane.b32.xlu0 %v330, 96
  %v334 = vpop.permute.xlu0 %333
  %v336 = vmul.f32 %v331, %v334
  %v337 = vmul.f32 %v318, %v286
  %v338 = vadd.f32 %v336, %v337
  %340 = vrot.lane.b32.xlu0 %v338, 96
  %v341 = vpop.permute.xlu0 %340
  %343 = vst.msk [vmem:[#allocation2 + $0x18] sm:$0xff] %vm130, %v341
  %v344 = vsel %vm130, %v341, 0
  %346 = vmatpush.msra.mxu0 0.0
  %347 = vmatpush.msra.mxu0 0.0
  %348 = vmatpush.msra.mxu0 0.0
  %349 = vmatpush.msra.mxu0 0.0
  %350 = vmatpush.msra.mxu0 0.0
  %351 = vmatpush.msra.mxu0 0.0
  %352 = vmatpush.msra.mxu0 0.0
  %353 = vmatpush.msra.mxu0 0.0
  %354 = vmatpush.msra.mxu0 0.0
  %355 = vmatpush.msra.mxu0 0.0
  %356 = vmatpush.msra.mxu0 0.0
  %357 = vmatpush.msra.mxu0 0.0
  %358 = vmatpush.msra.mxu0 %v27
  %359 = vmatpush.msra.mxu0 %v26
  %360 = vmatpush.msra.mxu0 %v25
  %361 = vmatpush.msra.mxu0 %v24
  %362 = vmatmul.f32.gmra.mxu0 %v344
  %v363 = vpop.f32.mrf.mxu0
  %v364 = vadd.f32 0.0, %v363
  %365 = vdwg.mxu0
  %v366 = vadd.f32 %v119, %v364
  %v367 = vmul.f32 %v366, 0.5
  %v368 = vtanh.pop %v367
  %v369 = vmul.f32 %v368, 0.5
  %v370 = vadd.f32 %v369, 0.5
  %v371 = vadd.f32 %v364, %v161
  %373 = vrot.lane.b32.xlu0 %v371, 64
  %v374 = vpop.permute.xlu0 %373
  %v376 = vmul.f32 %v370, %v374
  %378 = vrot.lane.b32.xlu0 %v376, 64
  %v379 = vpop.permute.xlu0 %378
  %v381 = vadd.f32 %v119, %v379
  %v382 = vtanh.pop %v381
  %v383 = vsub.f32 1.0, %v370
  %385 = vrot.lane.b32.xlu0 %v382, 96
  %v386 = vpop.permute.xlu0 %385
  %v388 = vmul.f32 %v383, %v386
  %v389 = vmul.f32 %v370, %v338
  %v390 = vadd.f32 %v388, %v389
  %392 = vrot.lane.b32.xlu0 %v390, 96
  %v393 = vpop.permute.xlu0 %392
  %395 = vst.msk [vmem:[#allocation2 + $0x20] sm:$0xff] %vm130, %v393
  %v396 = vsel %vm130, %v393, 0
  %398 = vmatpush.msra.mxu0 0.0
  %399 = vmatpush.msra.mxu0 0.0
  %400 = vmatpush.msra.mxu0 0.0
  %401 = vmatpush.msra.mxu0 0.0
  %402 = vmatpush.msra.mxu0 0.0
  %403 = vmatpush.msra.mxu0 0.0
  %404 = vmatpush.msra.mxu0 0.0
  %405 = vmatpush.msra.mxu0 0.0
  %406 = vmatpush.msra.mxu0 0.0
  %407 = vmatpush.msra.mxu0 0.0
  %408 = vmatpush.msra.mxu0 0.0
  %409 = vmatpush.msra.mxu0 0.0
  %410 = vmatpush.msra.mxu0 %v27
  %411 = vmatpush.msra.mxu0 %v26
  %412 = vmatpush.msra.mxu0 %v25
  %413 = vmatpush.msra.mxu0 %v24
  %414 = vmatmul.f32.gmra.mxu0 %v396
  %v415 = vpop.f32.mrf.mxu0
  %v416 = vadd.f32 0.0, %v415
  %417 = vdwg.mxu0
  %v418 = vadd.f32 %v122, %v416
  %v419 = vmul.f32 %v418, 0.5
  %v420 = vtanh.pop %v419
  %v421 = vmul.f32 %v420, 0.5
  %v422 = vadd.f32 %v421, 0.5
  %v423 = vadd.f32 %v416, %v161
  %425 = vrot.lane.b32.xlu0 %v423, 64
  %v426 = vpop.permute.xlu0 %425
  %v428 = vmul.f32 %v422, %v426
  %430 = vrot.lane.b32.xlu0 %v428, 64
  %v431 = vpop.permute.xlu0 %430
  %v433 = vadd.f32 %v122, %v431
  %v434 = vtanh.pop %v433
  %v435 = vsub.f32 1.0, %v422
  %437 = vrot.lane.b32.xlu0 %v434, 96
  %v438 = vpop.permute.xlu0 %437
  %v440 = vmul.f32 %v435, %v438
  %v441 = vmul.f32 %v422, %v390
  %v442 = vadd.f32 %v440, %v441
  %444 = vrot.lane.b32.xlu0 %v442, 96
  %v445 = vpop.permute.xlu0 %444
  %447 = vst.msk [vmem:[#allocation2 + $0x28] sm:$0xff] %vm130, %v445
  %v448 = vsel %vm130, %v445, 0
  %450 = vmatpush.msra.mxu0 0.0
  %451 = vmatpush.msra.mxu0 0.0
  %452 = vmatpush.msra.mxu0 0.0
  %453 = vmatpush.msra.mxu0 0.0
  %454 = vmatpush.msra.mxu0 0.0
  %455 = vmatpush.msra.mxu0 0.0
  %456 = vmatpush.msra.mxu0 0.0
  %457 = vmatpush.msra.mxu0 0.0
  %458 = vmatpush.msra.mxu0 0.0
  %459 = vmatpush.msra.mxu0 0.0
  %460 = vmatpush.msra.mxu0 0.0
  %461 = vmatpush.msra.mxu0 0.0
  %462 = vmatpush.msra.mxu0 %v27
  %463 = vmatpush.msra.mxu0 %v26
  %464 = vmatpush.msra.mxu0 %v25
  %465 = vmatpush.msra.mxu0 %v24
  %466 = vmatmul.f32.gmra.mxu0 %v448
  %v467 = vpop.f32.mrf.mxu0
  %v468 = vadd.f32 0.0, %v467
  %469 = vdwg.mxu0
  %v470 = vadd.f32 %v125, %v468
  %v471 = vmul.f32 %v470, 0.5
  %v472 = vtanh.pop %v471
  %v473 = vmul.f32 %v472, 0.5
  %v474 = vadd.f32 %v473, 0.5
  %v475 = vadd.f32 %v468, %v161
  %477 = vrot.lane.b32.xlu0 %v475, 64
  %v478 = vpop.permute.xlu0 %477
  %v480 = vmul.f32 %v474, %v478
  %482 = vrot.lane.b32.xlu0 %v480, 64
  %v483 = vpop.permute.xlu0 %482
  %v485 = vadd.f32 %v125, %v483
  %v486 = vtanh.pop %v485
  %v487 = vsub.f32 1.0, %v474
  %489 = vrot.lane.b32.xlu0 %v486, 96
  %v490 = vpop.permute.xlu0 %489
  %v492 = vmul.f32 %v487, %v490
  %v493 = vmul.f32 %v474, %v442
  %v494 = vadd.f32 %v492, %v493
  %496 = vrot.lane.b32.xlu0 %v494, 96
  %v497 = vpop.permute.xlu0 %496
  %499 = vst.msk [vmem:[#allocation2 + $0x30] sm:$0xff] %vm130, %v497
  %v500 = vsel %vm130, %v497, 0
  %502 = vmatpush.msra.mxu0 0.0
  %503 = vmatpush.msra.mxu0 0.0
  %504 = vmatpush.msra.mxu0 0.0
  %505 = vmatpush.msra.mxu0 0.0
  %506 = vmatpush.msra.mxu0 0.0
  %507 = vmatpush.msra.mxu0 0.0
  %508 = vmatpush.msra.mxu0 0.0
  %509 = vmatpush.msra.mxu0 0.0
  %510 = vmatpush.msra.mxu0 0.0
  %511 = vmatpush.msra.mxu0 0.0
  %512 = vmatpush.msra.mxu0 0.0
  %513 = vmatpush.msra.mxu0 0.0
  %514 = vmatpush.msra.mxu0 %v27
  %515 = vmatpush.msra.mxu0 %v26
  %516 = vmatpush.msra.mxu0 %v25
  %517 = vmatpush.msra.mxu0 %v24
  %518 = vmatmul.f32.gmra.mxu0 %v500
  %v519 = vpop.f32.mrf.mxu0
  %v520 = vadd.f32 0.0, %v519
  %521 = vdwg.mxu0
  %v522 = vadd.f32 %v128, %v520
  %v523 = vmul.f32 %v522, 0.5
  %v524 = vtanh.pop %v523
  %v525 = vmul.f32 %v524, 0.5
  %v526 = vadd.f32 %v525, 0.5
  %v527 = vadd.f32 %v520, %v161
  %529 = vrot.lane.b32.xlu0 %v527, 64
  %v530 = vpop.permute.xlu0 %529
  %v532 = vmul.f32 %v526, %v530
  %534 = vrot.lane.b32.xlu0 %v532, 64
  %v535 = vpop.permute.xlu0 %534
  %v537 = vadd.f32 %v128, %v535
  %v538 = vtanh.pop %v537
  %v539 = vsub.f32 1.0, %v526
  %541 = vrot.lane.b32.xlu0 %v538, 96
  %v542 = vpop.permute.xlu0 %541
  %v544 = vmul.f32 %v539, %v542
  %v545 = vmul.f32 %v526, %v494
  %v546 = vadd.f32 %v544, %v545
  %548 = vrot.lane.b32.xlu0 %v546, 96
  %v549 = vpop.permute.xlu0 %548
  %551 = vst.msk [vmem:[#allocation2 + $0x38] sm:$0xff] %vm130, %v549
  %v552 = vld [vmem:[#allocation2] sm:$0xff]
  %v553 = vld [vmem:[#allocation2 + $0x8] sm:$0xff]
  %v554 = vld [vmem:[#allocation2 + $0x10] sm:$0xff]
  %v555 = vld [vmem:[#allocation2 + $0x18] sm:$0xff]
  %v556 = vld [vmem:[#allocation2 + $0x20] sm:$0xff]
  %v557 = vld [vmem:[#allocation2 + $0x28] sm:$0xff]
  %v558 = vld [vmem:[#allocation2 + $0x30] sm:$0xff]
  %v559 = vld [vmem:[#allocation2 + $0x38] sm:$0xff]
  %v560 = vperm.slane %v38, 0
  %v562 = vsel %vm130, %v552, 0
  %v565 = vsel %vm130, %v553, 0
  %v568 = vsel %vm130, %v554, 0
  %v571 = vsel %vm130, %v555, 0
  %v574 = vsel %vm130, %v556, 0
  %v577 = vsel %vm130, %v557, 0
  %v580 = vsel %vm130, %v558, 0
  %v583 = vsel %vm130, %v559, 0
  %585 = vmatpush.msra.mxu0 0.0
  %586 = vmatpush.msra.mxu0 0.0
  %587 = vmatpush.msra.mxu0 0.0
  %588 = vmatpush.msra.mxu0 0.0
  %589 = vmatpush.msra.mxu0 0.0
  %590 = vmatpush.msra.mxu0 0.0
  %591 = vmatpush.msra.mxu0 0.0
  %592 = vmatpush.msra.mxu0 0.0
  %593 = vmatpush.msra.mxu0 0.0
  %594 = vmatpush.msra.mxu0 0.0
  %595 = vmatpush.msra.mxu0 0.0
  %596 = vmatpush.msra.mxu0 0.0
  %597 = vmatpush.msra.mxu0 %v33
  %598 = vmatpush.msra.mxu0 %v32
  %599 = vmatpush.msra.mxu0 %v31
  %600 = vmatpush.msra.mxu0 %v30
  %601 = vmatmul.f32.gmra.mxu0 %v562
  %v602 = vpop.f32.mrf.mxu0
  %v603 = vadd.f32 %v560, %v602
  %604 = vmatmul.f32.gmra.mxu0 %v565
  %v605 = vpop.f32.mrf.mxu0
  %v606 = vadd.f32 %v560, %v605
  %607 = vmatmul.f32.gmra.mxu0 %v568
  %v608 = vpop.f32.mrf.mxu0
  %v609 = vadd.f32 %v560, %v608
  %610 = vmatmul.f32.gmra.mxu0 %v571
  %v611 = vpop.f32.mrf.mxu0
  %v612 = vadd.f32 %v560, %v611
  %613 = vmatmul.f32.gmra.mxu0 %v574
  %v614 = vpop.f32.mrf.mxu0
  %v615 = vadd.f32 %v560, %v614
  %616 = vmatmul.f32.gmra.mxu0 %v577
  %v617 = vpop.f32.mrf.mxu0
  %v618 = vadd.f32 %v560, %v617
  %619 = vmatmul.f32.gmra.mxu0 %v580
  %v620 = vpop.f32.mrf.mxu0
  %v621 = vadd.f32 %v560, %v620
  %622 = vmatmul.f32.gmra.mxu0 %v583
  %v623 = vpop.f32.mrf.mxu0
  %v624 = vadd.f32 %v560, %v623
  %625 = vdwg.mxu0
  %626 = vmatpush.msra.mxu0 0.0
  %627 = vmatpush.msra.mxu0 0.0
  %628 = vmatpush.msra.mxu0 0.0
  %629 = vmatpush.msra.mxu0 0.0
  %630 = vmatpush.msra.mxu0 0.0
  %631 = vmatpush.msra.mxu0 0.0
  %632 = vmatpush.msra.mxu0 0.0
  %633 = vmatpush.msra.mxu0 0.0
  %634 = vmatpush.msra.mxu0 0.0
  %635 = vmatpush.msra.mxu0 0.0
  %636 = vmatpush.msra.mxu0 0.0
  %637 = vmatpush.msra.mxu0 0.0
  %638 = vmatpush.msra.mxu0 %v37
  %639 = vmatpush.msra.mxu0 %v36
  %640 = vmatpush.msra.mxu0 %v35
  %641 = vmatpush.msra.mxu0 %v34
  %642 = vmatmul.f32.gmra.mxu0 %v132
  %v643 = vpop.f32.mrf.mxu0
  %v644 = vadd.f32 0.0, %v643
  %645 = vdwg.mxu0
  %v646 = vadd.f32 %v603, %v644
  %v647 = vmul.f32 %v646, 0.5
  %v648 = vtanh.pop %v647
  %v649 = vmul.f32 %v648, 0.5
  %v650 = vadd.f32 %v649, 0.5
  %652 = vrot.lane.b32.xlu0 %v39, 64
  %v653 = vpop.permute.xlu0 %652
  %v655 = vadd.f32 %v644, %v653
  %657 = vrot.lane.b32.xlu0 %v655, 64
  %v658 = vpop.permute.xlu0 %657
  %v660 = vmul.f32 %v650, %v658
  %662 = vrot.lane.b32.xlu0 %v660, 64
  %v663 = vpop.permute.xlu0 %662
  %v665 = vadd.f32 %v603, %v663
  %v666 = vtanh.pop %v665
  %v667 = vsub.f32 1.0, %v650
  %669 = vrot.lane.b32.xlu0 %v666, 96
  %v670 = vpop.permute.xlu0 %669
  %v672 = vmul.f32 %v667, %v670
  %v673 = vmul.f32 %v650, 0.0
  %v674 = vadd.f32 %v672, %v673
  %676 = vrot.lane.b32.xlu0 %v674, 96
  %v677 = vpop.permute.xlu0 %676
  %v678 = vsel %vm130, %v677, 0
  %680 = vmatpush.msra.mxu0 0.0
  %681 = vmatpush.msra.mxu0 0.0
  %682 = vmatpush.msra.mxu0 0.0
  %683 = vmatpush.msra.mxu0 0.0
  %684 = vmatpush.msra.mxu0 0.0
  %685 = vmatpush.msra.mxu0 0.0
  %686 = vmatpush.msra.mxu0 0.0
  %687 = vmatpush.msra.mxu0 0.0
  %688 = vmatpush.msra.mxu0 0.0
  %689 = vmatpush.msra.mxu0 0.0
  %690 = vmatpush.msra.mxu0 0.0
  %691 = vmatpush.msra.mxu0 0.0
  %692 = vmatpush.msra.mxu0 %v37
  %693 = vmatpush.msra.mxu0 %v36
  %694 = vmatpush.msra.mxu0 %v35
  %695 = vmatpush.msra.mxu0 %v34
  %696 = vmatmul.f32.gmra.mxu0 %v678
  %v697 = vpop.f32.mrf.mxu0
  %v698 = vadd.f32 0.0, %v697
  %699 = vdwg.mxu0
  %v700 = vadd.f32 %v606, %v698
  %v701 = vmul.f32 %v700, 0.5
  %v702 = vtanh.pop %v701
  %v703 = vmul.f32 %v702, 0.5
  %v704 = vadd.f32 %v703, 0.5
  %v705 = vadd.f32 %v698, %v653
  %707 = vrot.lane.b32.xlu0 %v705, 64
  %v708 = vpop.permute.xlu0 %707
  %v710 = vmul.f32 %v704, %v708
  %712 = vrot.lane.b32.xlu0 %v710, 64
  %v713 = vpop.permute.xlu0 %712
  %v715 = vadd.f32 %v606, %v713
  %v716 = vtanh.pop %v715
  %v717 = vsub.f32 1.0, %v704
  %719 = vrot.lane.b32.xlu0 %v716, 96
  %v720 = vpop.permute.xlu0 %719
  %v722 = vmul.f32 %v717, %v720
  %v723 = vmul.f32 %v704, %v674
  %v724 = vadd.f32 %v722, %v723
  %726 = vrot.lane.b32.xlu0 %v724, 96
  %v727 = vpop.permute.xlu0 %726
  %v728 = vsel %vm130, %v727, 0
  %730 = vmatpush.msra.mxu0 0.0
  %731 = vmatpush.msra.mxu0 0.0
  %732 = vmatpush.msra.mxu0 0.0
  %733 = vmatpush.msra.mxu0 0.0
  %734 = vmatpush.msra.mxu0 0.0
  %735 = vmatpush.msra.mxu0 0.0
  %736 = vmatpush.msra.mxu0 0.0
  %737 = vmatpush.msra.mxu0 0.0
  %738 = vmatpush.msra.mxu0 0.0
  %739 = vmatpush.msra.mxu0 0.0
  %740 = vmatpush.msra.mxu0 0.0
  %741 = vmatpush.msra.mxu0 0.0
  %742 = vmatpush.msra.mxu0 %v37
  %743 = vmatpush.msra.mxu0 %v36
  %744 = vmatpush.msra.mxu0 %v35
  %745 = vmatpush.msra.mxu0 %v34
  %746 = vmatmul.f32.gmra.mxu0 %v728
  %v747 = vpop.f32.mrf.mxu0
  %v748 = vadd.f32 0.0, %v747
  %749 = vdwg.mxu0
  %v750 = vadd.f32 %v609, %v748
  %v751 = vmul.f32 %v750, 0.5
  %v752 = vtanh.pop %v751
  %v753 = vmul.f32 %v752, 0.5
  %v754 = vadd.f32 %v753, 0.5
  %v755 = vadd.f32 %v748, %v653
  %757 = vrot.lane.b32.xlu0 %v755, 64
  %v758 = vpop.permute.xlu0 %757
  %v760 = vmul.f32 %v754, %v758
  %762 = vrot.lane.b32.xlu0 %v760, 64
  %v763 = vpop.permute.xlu0 %762
  %v765 = vadd.f32 %v609, %v763
  %v766 = vtanh.pop %v765
  %v767 = vsub.f32 1.0, %v754
  %769 = vrot.lane.b32.xlu0 %v766, 96
  %v770 = vpop.permute.xlu0 %769
  %v772 = vmul.f32 %v767, %v770
  %v773 = vmul.f32 %v754, %v724
  %v774 = vadd.f32 %v772, %v773
  %776 = vrot.lane.b32.xlu0 %v774, 96
  %v777 = vpop.permute.xlu0 %776
  %v778 = vsel %vm130, %v777, 0
  %780 = vmatpush.msra.mxu0 0.0
  %781 = vmatpush.msra.mxu0 0.0
  %782 = vmatpush.msra.mxu0 0.0
  %783 = vmatpush.msra.mxu0 0.0
  %784 = vmatpush.msra.mxu0 0.0
  %785 = vmatpush.msra.mxu0 0.0
  %786 = vmatpush.msra.mxu0 0.0
  %787 = vmatpush.msra.mxu0 0.0
  %788 = vmatpush.msra.mxu0 0.0
  %789 = vmatpush.msra.mxu0 0.0
  %790 = vmatpush.msra.mxu0 0.0
  %791 = vmatpush.msra.mxu0 0.0
  %792 = vmatpush.msra.mxu0 %v37
  %793 = vmatpush.msra.mxu0 %v36
  %794 = vmatpush.msra.mxu0 %v35
  %795 = vmatpush.msra.mxu0 %v34
  %796 = vmatmul.f32.gmra.mxu0 %v778
  %v797 = vpop.f32.mrf.mxu0
  %v798 = vadd.f32 0.0, %v797
  %799 = vdwg.mxu0
  %v800 = vadd.f32 %v612, %v798
  %v801 = vmul.f32 %v800, 0.5
  %v802 = vtanh.pop %v801
  %v803 = vmul.f32 %v802, 0.5
  %v804 = vadd.f32 %v803, 0.5
  %v805 = vadd.f32 %v798, %v653
  %807 = vrot.lane.b32.xlu0 %v805, 64
  %v808 = vpop.permute.xlu0 %807
  %v810 = vmul.f32 %v804, %v808
  %812 = vrot.lane.b32.xlu0 %v810, 64
  %v813 = vpop.permute.xlu0 %812
  %v815 = vadd.f32 %v612, %v813
  %v816 = vtanh.pop %v815
  %v817 = vsub.f32 1.0, %v804
  %819 = vrot.lane.b32.xlu0 %v816, 96
  %v820 = vpop.permute.xlu0 %819
  %v822 = vmul.f32 %v817, %v820
  %v823 = vmul.f32 %v804, %v774
  %v824 = vadd.f32 %v822, %v823
  %826 = vrot.lane.b32.xlu0 %v824, 96
  %v827 = vpop.permute.xlu0 %826
  %v828 = vsel %vm130, %v827, 0
  %830 = vmatpush.msra.mxu0 0.0
  %831 = vmatpush.msra.mxu0 0.0
  %832 = vmatpush.msra.mxu0 0.0
  %833 = vmatpush.msra.mxu0 0.0
  %834 = vmatpush.msra.mxu0 0.0
  %835 = vmatpush.msra.mxu0 0.0
  %836 = vmatpush.msra.mxu0 0.0
  %837 = vmatpush.msra.mxu0 0.0
  %838 = vmatpush.msra.mxu0 0.0
  %839 = vmatpush.msra.mxu0 0.0
  %840 = vmatpush.msra.mxu0 0.0
  %841 = vmatpush.msra.mxu0 0.0
  %842 = vmatpush.msra.mxu0 %v37
  %843 = vmatpush.msra.mxu0 %v36
  %844 = vmatpush.msra.mxu0 %v35
  %845 = vmatpush.msra.mxu0 %v34
  %846 = vmatmul.f32.gmra.mxu0 %v828
  %v847 = vpop.f32.mrf.mxu0
  %v848 = vadd.f32 0.0, %v847
  %849 = vdwg.mxu0
  %v850 = vadd.f32 %v615, %v848
  %v851 = vmul.f32 %v850, 0.5
  %v852 = vtanh.pop %v851
  %v853 = vmul.f32 %v852, 0.5
  %v854 = vadd.f32 %v853, 0.5
  %v855 = vadd.f32 %v848, %v653
  %857 = vrot.lane.b32.xlu0 %v855, 64
  %v858 = vpop.permute.xlu0 %857
  %v860 = vmul.f32 %v854, %v858
  %862 = vrot.lane.b32.xlu0 %v860, 64
  %v863 = vpop.permute.xlu0 %862
  %v865 = vadd.f32 %v615, %v863
  %v866 = vtanh.pop %v865
  %v867 = vsub.f32 1.0, %v854
  %869 = vrot.lane.b32.xlu0 %v866, 96
  %v870 = vpop.permute.xlu0 %869
  %v872 = vmul.f32 %v867, %v870
  %v873 = vmul.f32 %v854, %v824
  %v874 = vadd.f32 %v872, %v873
  %876 = vrot.lane.b32.xlu0 %v874, 96
  %v877 = vpop.permute.xlu0 %876
  %v878 = vsel %vm130, %v877, 0
  %880 = vmatpush.msra.mxu0 0.0
  %881 = vmatpush.msra.mxu0 0.0
  %882 = vmatpush.msra.mxu0 0.0
  %883 = vmatpush.msra.mxu0 0.0
  %884 = vmatpush.msra.mxu0 0.0
  %885 = vmatpush.msra.mxu0 0.0
  %886 = vmatpush.msra.mxu0 0.0
  %887 = vmatpush.msra.mxu0 0.0
  %888 = vmatpush.msra.mxu0 0.0
  %889 = vmatpush.msra.mxu0 0.0
  %890 = vmatpush.msra.mxu0 0.0
  %891 = vmatpush.msra.mxu0 0.0
  %892 = vmatpush.msra.mxu0 %v37
  %893 = vmatpush.msra.mxu0 %v36
  %894 = vmatpush.msra.mxu0 %v35
  %895 = vmatpush.msra.mxu0 %v34
  %896 = vmatmul.f32.gmra.mxu0 %v878
  %v897 = vpop.f32.mrf.mxu0
  %v898 = vadd.f32 0.0, %v897
  %899 = vdwg.mxu0
  %v900 = vadd.f32 %v618, %v898
  %v901 = vmul.f32 %v900, 0.5
  %v902 = vtanh.pop %v901
  %v903 = vmul.f32 %v902, 0.5
  %v904 = vadd.f32 %v903, 0.5
  %v905 = vadd.f32 %v898, %v653
  %907 = vrot.lane.b32.xlu0 %v905, 64
  %v908 = vpop.permute.xlu0 %907
  %v910 = vmul.f32 %v904, %v908
  %912 = vrot.lane.b32.xlu0 %v910, 64
  %v913 = vpop.permute.xlu0 %912
  %v915 = vadd.f32 %v618, %v913
  %v916 = vtanh.pop %v915
  %v917 = vsub.f32 1.0, %v904
  %919 = vrot.lane.b32.xlu0 %v916, 96
  %v920 = vpop.permute.xlu0 %919
  %v922 = vmul.f32 %v917, %v920
  %v923 = vmul.f32 %v904, %v874
  %v924 = vadd.f32 %v922, %v923
  %926 = vrot.lane.b32.xlu0 %v924, 96
  %v927 = vpop.permute.xlu0 %926
  %v928 = vsel %vm130, %v927, 0
  %930 = vmatpush.msra.mxu0 0.0
  %931 = vmatpush.msra.mxu0 0.0
  %932 = vmatpush.msra.mxu0 0.0
  %933 = vmatpush.msra.mxu0 0.0
  %934 = vmatpush.msra.mxu0 0.0
  %935 = vmatpush.msra.mxu0 0.0
  %936 = vmatpush.msra.mxu0 0.0
  %937 = vmatpush.msra.mxu0 0.0
  %938 = vmatpush.msra.mxu0 0.0
  %939 = vmatpush.msra.mxu0 0.0
  %940 = vmatpush.msra.mxu0 0.0
  %941 = vmatpush.msra.mxu0 0.0
  %942 = vmatpush.msra.mxu0 %v37
  %943 = vmatpush.msra.mxu0 %v36
  %944 = vmatpush.msra.mxu0 %v35
  %945 = vmatpush.msra.mxu0 %v34
  %946 = vmatmul.f32.gmra.mxu0 %v928
  %v947 = vpop.f32.mrf.mxu0
  %v948 = vadd.f32 0.0, %v947
  %949 = vdwg.mxu0
  %v950 = vadd.f32 %v621, %v948
  %v951 = vmul.f32 %v950, 0.5
  %v952 = vtanh.pop %v951
  %v953 = vmul.f32 %v952, 0.5
  %v954 = vadd.f32 %v953, 0.5
  %v955 = vadd.f32 %v948, %v653
  %957 = vrot.lane.b32.xlu0 %v955, 64
  %v958 = vpop.permute.xlu0 %957
  %v960 = vmul.f32 %v954, %v958
  %962 = vrot.lane.b32.xlu0 %v960, 64
  %v963 = vpop.permute.xlu0 %962
  %v965 = vadd.f32 %v621, %v963
  %v966 = vtanh.pop %v965
  %v967 = vsub.f32 1.0, %v954
  %969 = vrot.lane.b32.xlu0 %v966, 96
  %v970 = vpop.permute.xlu0 %969
  %v972 = vmul.f32 %v967, %v970
  %v973 = vmul.f32 %v954, %v924
  %v974 = vadd.f32 %v972, %v973
  %976 = vrot.lane.b32.xlu0 %v974, 96
  %v977 = vpop.permute.xlu0 %976
  %v978 = vsel %vm130, %v977, 0
  %980 = vmatpush.msra.mxu0 0.0
  %981 = vmatpush.msra.mxu0 0.0
  %982 = vmatpush.msra.mxu0 0.0
  %983 = vmatpush.msra.mxu0 0.0
  %984 = vmatpush.msra.mxu0 0.0
  %985 = vmatpush.msra.mxu0 0.0
  %986 = vmatpush.msra.mxu0 0.0
  %987 = vmatpush.msra.mxu0 0.0
  %988 = vmatpush.msra.mxu0 0.0
  %989 = vmatpush.msra.mxu0 0.0
  %990 = vmatpush.msra.mxu0 0.0
  %991 = vmatpush.msra.mxu0 0.0
  %992 = vmatpush.msra.mxu0 %v37
  %993 = vmatpush.msra.mxu0 %v36
  %994 = vmatpush.msra.mxu0 %v35
  %995 = vmatpush.msra.mxu0 %v34
  %996 = vmatmul.f32.gmra.mxu0 %v978
  %v997 = vpop.f32.mrf.mxu0
  %v998 = vadd.f32 0.0, %v997
  %999 = vdwg.mxu0
  %v1000 = vadd.f32 %v624, %v998
  %v1001 = vmul.f32 %v1000, 0.5
  %v1002 = vtanh.pop %v1001
  %v1003 = vmul.f32 %v1002, 0.5
  %v1004 = vadd.f32 %v1003, 0.5
  %v1005 = vadd.f32 %v998, %v653
  %1007 = vrot.lane.b32.xlu0 %v1005, 64
  %v1008 = vpop.permute.xlu0 %1007
  %v1010 = vmul.f32 %v1004, %v1008
  %1012 = vrot.lane.b32.xlu0 %v1010, 64
  %v1013 = vpop.permute.xlu0 %1012
  %v1015 = vadd.f32 %v624, %v1013
  %v1016 = vtanh.pop %v1015
  %v1017 = vsub.f32 1.0, %v1004
  %1019 = vrot.lane.b32.xlu0 %v1016, 96
  %v1020 = vpop.permute.xlu0 %1019
  %v1022 = vmul.f32 %v1017, %v1020
  %v1023 = vmul.f32 %v1004, %v974
  %v1024 = vadd.f32 %v1022, %v1023
  %1026 = vrot.lane.b32.xlu0 %v1024, 96
  %v1027 = vpop.permute.xlu0 %1026
  %v1028 = vsel %vm130, %v1027, 0
  %1030 = vmatpush.msra.mxu0 0.0
  %1031 = vmatpush.msra.mxu0 0.0
  %1032 = vmatpush.msra.mxu0 0.0
  %1033 = vmatpush.msra.mxu0 0.0
  %1034 = vmatpush.msra.mxu0 0.0
  %1035 = vmatpush.msra.mxu0 0.0
  %1036 = vmatpush.msra.mxu0 0.0
  %1037 = vmatpush.msra.mxu0 0.0
  %1038 = vmatpush.msra.mxu0 0.0
  %1039 = vmatpush.msra.mxu0 0.0
  %1040 = vmatpush.msra.mxu0 0.0
  %1041 = vmatpush.msra.mxu0 0.0
  %1042 = vmatpush.msra.mxu0 %v43
  %1043 = vmatpush.msra.mxu0 %v42
  %1044 = vmatpush.msra.mxu0 %v41
  %1045 = vmatpush.msra.mxu0 %v40
  %1046 = vmatmul.f32.gmra.mxu0 %v1028
  %v1047 = vpop.f32.mrf.mxu0
  %v1048 = vadd.f32 %v44, %v1047
  %1049 = vdwg.mxu0
  %v1050 = vmax.f32 %v1048, 0.0
  %vm1051 = vcmask 523264
  %v1053 = vsel %vm1051, %v1050, 0
  %1055 = vmatpush.msra.mxu0 0.0
  %1056 = vmatpush.msra.mxu0 0.0
  %1057 = vmatpush.msra.mxu0 0.0
  %1058 = vmatpush.msra.mxu0 0.0
  %1059 = vmatpush.msra.mxu0 0.0
  %1060 = vmatpush.msra.mxu0 0.0
  %1061 = vmatpush.msra.mxu0 0.0
  %1062 = vmatpush.msra.mxu0 0.0
  %1063 = vmatpush.msra.mxu0 %v52
  %1064 = vmatpush.msra.mxu0 %v51
  %1065 = vmatpush.msra.mxu0 %v50
  %1066 = vmatpush.msra.mxu0 %v49
  %1067 = vmatpush.msra.mxu0 %v48
  %1068 = vmatpush.msra.mxu0 %v47
  %1069 = vmatpush.msra.mxu0 %v46
  %1070 = vmatpush.msra.mxu0 %v45
  %1071 = vmatmul.f32.gmra.mxu0 %v1053
  %v1072 = vpop.f32.mrf.mxu0
  %v1073 = vadd.f32 %v53, %v1072
  %1074 = vdwg.mxu0
  %v1075 = vmax.f32 %v1073, 0.0
  %v1077 = vsel %vm1051, %v1075, 0
  %1079 = vmatpush.msra.mxu0 0.0
  %1080 = vmatpush.msra.mxu0 0.0
  %1081 = vmatpush.msra.mxu0 0.0
  %1082 = vmatpush.msra.mxu0 0.0
  %1083 = vmatpush.msra.mxu0 0.0
  %1084 = vmatpush.msra.mxu0 0.0
  %1085 = vmatpush.msra.mxu0 0.0
  %1086 = vmatpush.msra.mxu0 0.0
  %1087 = vmatpush.msra.mxu0 %v61
  %1088 = vmatpush.msra.mxu0 %v60
  %1089 = vmatpush.msra.mxu0 %v59
  %1090 = vmatpush.msra.mxu0 %v58
  %1091 = vmatpush.msra.mxu0 %v57
  %1092 = vmatpush.msra.mxu0 %v56
  %1093 = vmatpush.msra.mxu0 %v55
  %1094 = vmatpush.msra.mxu0 %v54
  %1095 = vmatmul.f32.gmra.mxu0 %v1077
  %v1096 = vpop.f32.mrf.mxu0
  %v1097 = vadd.f32 %v62, %v1096
  %1098 = vdwg.mxu0
  %1099 = vst.msk [vmem:[%s3] sm:$0xff] %vm1051, %v1097
  // Predicated region
  $region14: #{duel_dqn_rnn.1} parent=0 // pred_check
    _
  $region15: #{duel_dqn_rnn.1} parent=0 // pred_check_branch
    %1101 = sbr.rel (0) target = $region17
  $region16: #{duel_dqn_rnn.1} parent=0 // pred_region
    _
  $region17: #{duel_dqn_rnn.1} parent=0 // pred_fallthru
    _
  // Predicated region
  $region18: #{duel_dqn_rnn.1} parent=0 // pred_check
    _
  $region19: #{duel_dqn_rnn.1} parent=0 // pred_check_branch
    %1103 = sbr.rel (0) target = $region21
  $region20: #{duel_dqn_rnn.1} parent=0 // pred_region
    _
  $region21: #{duel_dqn_rnn.1} parent=0 // pred_fallthru
    _

</llo_original>
